<compile_context>
chip_gen: v6e
topology: v6e:2x2x1
jax: 0.10.0
libtpu: 0.0.40
codegen_flags: <defaults>
</compile_context>

<pallas_src>
import functools
import math

import jax
import jax.numpy as jnp
import numpy as np
from jax import lax
from jax.experimental import pallas as pl
from jax.experimental.pallas import tpu as pltpu

# ---------------------------------------------------------------------------
# Small synthetic BERT config (shapes consistent with the module's forward).
# ---------------------------------------------------------------------------
VOCAB = 100
TYPE_VOCAB = 2
MAX_POS = 64
HIDDEN = 32
NUM_HEADS = 2
HEAD_DIM = HIDDEN // NUM_HEADS
INTERMEDIATE = 64
NUM_LAYERS = 2
NUM_LABELS = 3
LN_EPS = 1e-12
QKV_PAD = 128          # packed QKV projection width, padded 3*HIDDEN=96 -> 128 lanes
HEAD_PAD = 128         # lane-dense padded width for the tiny output heads

BATCH = 2
SEQ = 8
TOKENS = BATCH * SEQ


def _layernorm(h, gamma, beta, eps):
    """Row LayerNorm over the last dim, f32 statistics."""
    mu = jnp.mean(h, axis=-1, keepdims=True)
    var = jnp.mean(jnp.square(h - mu), axis=-1, keepdims=True)
    return (h - mu) * lax.rsqrt(var + eps) * gamma + beta


# ---------------------------------------------------------------------------
# The fused encoder + heads kernel.  One grid step == one transformer layer.
#   inputs with a leading layer axis are selected by index_map (auto
#   double-buffered); everything else uses a constant index_map and is DMA'd
#   once.  The residual stream h lives in VMEM scratch across grid steps.
# ---------------------------------------------------------------------------
def _encoder_kernel(we_ref, pe_ref, te_ref, mask_ref, emb_g_ref, emb_b_ref,
                    qkv_w_ref, qkv_b_ref, ao_w_ref, ao_b_ref,
                    ln1_g_ref, ln1_b_ref,
                    ff1_w_ref, ff1_b_ref, ff2_w_ref, ff2_b_ref,
                    ln2_g_ref, ln2_b_ref,
                    pool_w_ref, pool_b_ref, pos_w_ref, pos_b_ref,
                    head_w_ref, head_b_ref,
                    pos_o_ref, head_o_ref,
                    h_scr,
                    *, batch, seq, num_heads, head_dim, hidden, eps, scale,
                    num_labels):
    layer = pl.program_id(0)

    # ---- layer 0: embeddings add + LayerNorm into the VMEM-resident residual
    @pl.when(layer == 0)
    def _():
        emb = we_ref[...] + pe_ref[...] + te_ref[...]
        h_scr[...] = _layernorm(emb, emb_g_ref[...], emb_b_ref[...], eps)

    x = h_scr[...]                                   # (B*S, H) f32 residual
    x16 = x.astype(jnp.bfloat16)

    # ---- attention: packed QKV projection — one MXU push, N = 128 lanes ----
    qkv = (jnp.dot(x16, qkv_w_ref[...], preferred_element_type=jnp.float32)
           + qkv_b_ref[...])                         # (B*S, 128) f32
    qkv16 = qkv.astype(jnp.bfloat16).reshape(batch, seq, -1)   # single cast

    mask = mask_ref[...]                             # (B, 1, S) additive mask
    ctx_heads = []
    for hi in range(num_heads):                      # static unroll over heads
        off = hi * head_dim
        qh = qkv16[:, :, off:off + head_dim]                          # (B,S,HD)
        kh = qkv16[:, :, hidden + off:hidden + off + head_dim]
        vh = qkv16[:, :, 2 * hidden + off:2 * hidden + off + head_dim]
        s = (jnp.einsum("bqd,bkd->bqk", qh, kh,
                        preferred_element_type=jnp.float32) * scale + mask)
        s = s - jnp.max(s, axis=-1, keepdims=True)
        p = jnp.exp(s)
        p = p * pl.reciprocal(jnp.sum(p, axis=-1, keepdims=True), approx=True)
        ctx_heads.append(jnp.einsum("bqk,bkd->bqd", p.astype(jnp.bfloat16), vh,
                                    preferred_element_type=jnp.float32))
    # one output projection on the concatenated context slab
    ctx = jnp.concatenate(ctx_heads, axis=-1).reshape(batch * seq, hidden)
    attn = (jnp.dot(ctx.astype(jnp.bfloat16), ao_w_ref[...],
                    preferred_element_type=jnp.float32) + ao_b_ref[...])
    h1 = _layernorm(attn + x, ln1_g_ref[...], ln1_b_ref[...], eps)

    # ---- FFN block: FF1 + GELU + FF2 + residual + LayerNorm ----------------
    f = (jnp.dot(h1.astype(jnp.bfloat16), ff1_w_ref[...],
                 preferred_element_type=jnp.float32) + ff1_b_ref[...])
    # TODO(synk): HF BERT default is exact (erf) GELU; tanh approximation is
    # used here for portable Mosaic lowering.
    f = jax.nn.gelu(f, approximate=True)
    f2 = (jnp.dot(f.astype(jnp.bfloat16), ff2_w_ref[...],
                  preferred_element_type=jnp.float32) + ff2_b_ref[...])
    h2 = _layernorm(f2 + h1, ln2_g_ref[...], ln2_b_ref[...], eps)
    h_scr[...] = h2                                  # carry to next layer

    # ---- heads, fused into the final grid step (lane-dense 128-wide stores)
    @pl.when(layer == pl.num_programs(0) - 1)
    def _():
        seq16 = h2.astype(jnp.bfloat16)
        pos_o_ref[...] = (jnp.dot(seq16, pos_w_ref[...],
                                  preferred_element_type=jnp.float32)
                          + pos_b_ref[...])                     # (B*S, 128)
        cls = h2.reshape(batch, seq, hidden)[:, 0, :]           # (B, H) CLS rows
        pooled = jnp.tanh(jnp.dot(cls.astype(jnp.bfloat16), pool_w_ref[...],
                                  preferred_element_type=jnp.float32)
                          + pool_b_ref[...])                    # (B, H)
        z = (jnp.dot(pooled.astype(jnp.bfloat16), head_w_ref[...],
                     preferred_element_type=jnp.float32) + head_b_ref[...])
        # columns: [0, NUM_LABELS) classifier logits,
        #          [NUM_LABELS, NUM_LABELS+2) reg_start / reg_end (sigmoid)
        col = lax.broadcasted_iota(jnp.int32, z.shape, 1)
        is_reg = (col >= num_labels) & (col < num_labels + 2)
        head_o_ref[...] = jnp.where(is_reg, jax.nn.sigmoid(z), z)  # (B, 128)


def encoder_and_heads(params, we, pe, te, mask_add):
    """One pallas_call: full encoder (layer grid) + all output heads."""
    def const2(d0, d1):
        return pl.BlockSpec((d0, d1), lambda l: (0, 0))

    def const3(d0, d1, d2):
        return pl.BlockSpec((d0, d1, d2), lambda l: (0, 0, 0))

    def per_layer(d1, d2):   # leading layer axis squeezed away inside kernel
        return pl.BlockSpec((None, d1, d2), lambda l: (l, 0, 0))

    kernel = functools.partial(
        _encoder_kernel,
        batch=BATCH, seq=SEQ, num_heads=NUM_HEADS, head_dim=HEAD_DIM,
        hidden=HIDDEN, eps=LN_EPS, scale=1.0 / math.sqrt(HEAD_DIM),
        num_labels=NUM_LABELS)

    grid_spec = pltpu.PrefetchScalarGridSpec(
        num_scalar_prefetch=0,
        grid=(NUM_LAYERS,),
        in_specs=[
            const2(TOKENS, HIDDEN),            # word embeddings (gathered)
            const2(TOKENS, HIDDEN),            # position embeddings
            const2(TOKENS, HIDDEN),            # token-type embeddings
            const3(BATCH, 1, SEQ),             # additive attention mask
            const2(1, HIDDEN),                 # emb LayerNorm gamma
            const2(1, HIDDEN),                 # emb LayerNorm beta
            per_layer(HIDDEN, QKV_PAD),        # packed QKV weights
            per_layer(1, QKV_PAD),             # packed QKV bias
            per_layer(HIDDEN, HIDDEN),         # attention output proj weight
            per_layer(1, HIDDEN),              # attention output proj bias
            per_layer(1, HIDDEN),              # LN1 gamma
            per_layer(1, HIDDEN),              # LN1 beta
            per_layer(HIDDEN, INTERMEDIATE),   # FF1 weight
            per_layer(1, INTERMEDIATE),        # FF1 bias
            per_layer(INTERMEDIATE, HIDDEN),   # FF2 weight
            per_layer(1, HIDDEN),              # FF2 bias
            per_layer(1, HIDDEN),              # LN2 gamma
            per_layer(1, HIDDEN),              # LN2 beta
            const2(HIDDEN, HIDDEN),            # pooler weight
            const2(1, HIDDEN),                 # pooler bias
            const2(HIDDEN, HEAD_PAD),          # position_outputs weight (padded)
            const2(1, HEAD_PAD),               # position_outputs bias
            const2(HIDDEN, HEAD_PAD),          # classifier+reg weight (padded)
            const2(1, HEAD_PAD),               # classifier+reg bias
        ],
        out_specs=(
            const2(TOKENS, HEAD_PAD),          # start/end logits (padded)
            const2(BATCH, HEAD_PAD),           # cls / reg_start / reg_end (padded)
        ),
        scratch_shapes=[pltpu.VMEM((TOKENS, HIDDEN), jnp.float32)],
    )

    return pl.pallas_call(
        kernel,
        grid_spec=grid_spec,
        out_shape=(jax.ShapeDtypeStruct((TOKENS, HEAD_PAD), jnp.float32),
                   jax.ShapeDtypeStruct((BATCH, HEAD_PAD), jnp.float32)),
        compiler_params=pltpu.CompilerParams(
            dimension_semantics=("arbitrary",)),
    )(we, pe, te, mask_add,
      params["emb_ln_g"], params["emb_ln_b"],
      params["qkv_w"], params["qkv_b"], params["ao_w"], params["ao_b"],
      params["ln1_g"], params["ln1_b"],
      params["ff1_w"], params["ff1_b"], params["ff2_w"], params["ff2_b"],
      params["ln2_g"], params["ln2_b"],
      params["pool_w"], params["pool_b"], params["pos_w"], params["pos_b"],
      params["head_w"], params["head_b"])


# ---------------------------------------------------------------------------
# Parameter initialization (deterministic, synthetic weights).
#   * per-layer weights stacked with a leading layer axis (grid-indexed).
#   * packed QKV columns: [Q_h0|Q_h1|K_h0|K_h1|V_h0|V_h1|zero-pad] (96 -> 128).
#   * tiny head weights zero-padded to 128 lanes for lane-dense stores.
#   * matmul weights bf16; biases / LN params / embeddings f32.
# In a real port, HF q/k/v weights would be transposed + concatenated into the
# packed slabs below.
# ---------------------------------------------------------------------------
def init_params(key):
    keys = iter(jax.random.split(key, 40))

    def nrm(shape, scale=0.02):
        return jax.random.normal(next(keys), shape, jnp.float32) * scale

    def pad_last(w, width):
        out = jnp.zeros(w.shape[:-1] + (width,), jnp.float32)
        return out.at[..., :w.shape[-1]].set(w)

    qkv_w = pad_last(nrm((NUM_LAYERS, HIDDEN, 3 * HIDDEN)), QKV_PAD)
    qkv_b = pad_last(nrm((NUM_LAYERS, 1, 3 * HIDDEN)), QKV_PAD)
    pos_w = pad_last(nrm((HIDDEN, 2)), HEAD_PAD)
    pos_b = pad_last(nrm((1, 2)), HEAD_PAD)
    head_w = pad_last(nrm((HIDDEN, NUM_LABELS + 2)), HEAD_PAD)
    head_b = pad_last(nrm((1, NUM_LABELS + 2)), HEAD_PAD)

    return {
        "word_emb": nrm((VOCAB, HIDDEN)),
        "pos_emb": nrm((MAX_POS, HIDDEN)),
        "type_emb": nrm((TYPE_VOCAB, HIDDEN)),
        "emb_ln_g": jnp.ones((1, HIDDEN), jnp.float32),
        "emb_ln_b": jnp.zeros((1, HIDDEN), jnp.float32),
        # stacked encoder weights (leading layer axis, selected by the grid)
        "qkv_w": qkv_w.astype(jnp.bfloat16),       # (L, H, 128)
        "qkv_b": qkv_b,                            # (L, 1, 128)
        "ao_w": nrm((NUM_LAYERS, HIDDEN, HIDDEN)).astype(jnp.bfloat16),
        "ao_b": nrm((NUM_LAYERS, 1, HIDDEN)),
        "ln1_g": jnp.ones((NUM_LAYERS, 1, HIDDEN), jnp.float32),
        "ln1_b": jnp.zeros((NUM_LAYERS, 1, HIDDEN), jnp.float32),
        "ff1_w": nrm((NUM_LAYERS, HIDDEN, INTERMEDIATE)).astype(jnp.bfloat16),
        "ff1_b": nrm((NUM_LAYERS, 1, INTERMEDIATE)),
        "ff2_w": nrm((NUM_LAYERS, INTERMEDIATE, HIDDEN)).astype(jnp.bfloat16),
        "ff2_b": nrm((NUM_LAYERS, 1, HIDDEN)),
        "ln2_g": jnp.ones((NUM_LAYERS, 1, HIDDEN), jnp.float32),
        "ln2_b": jnp.zeros((NUM_LAYERS, 1, HIDDEN), jnp.float32),
        # heads
        "pool_w": nrm((HIDDEN, HIDDEN)).astype(jnp.bfloat16),
        "pool_b": nrm((1, HIDDEN)),
        "pos_w": pos_w.astype(jnp.bfloat16), "pos_b": pos_b,
        "head_w": head_w.astype(jnp.bfloat16), "head_b": head_b,
    }


# ---------------------------------------------------------------------------
# Forward pass: ONE pallas_call.  Embedding-table gathers remain JAX glue.
# ---------------------------------------------------------------------------
def bert_qa_forward(params, input_ids, attention_mask=None, token_type_ids=None,
                    position_ids=None, head_mask=None):
    del head_mask  # TODO(synk): head_mask not supported (None in this model)
    B, S = input_ids.shape
    if attention_mask is None:
        attention_mask = jnp.ones((B, S), jnp.float32)
    if token_type_ids is None:
        token_type_ids = jnp.zeros((B, S), jnp.int32)
    if position_ids is None:
        position_ids = jnp.broadcast_to(jnp.arange(S, dtype=jnp.int32), (B, S))

    # TODO(synk): embedding gathers stay in JAX (XLA fuses them); a manual
    # DMA-gather Pallas path is not worth it at these shapes.
    we = jnp.take(params["word_emb"], input_ids.reshape(-1), axis=0)
    pe = jnp.take(params["pos_emb"], position_ids.reshape(-1), axis=0)
    te = jnp.take(params["type_emb"], token_type_ids.reshape(-1), axis=0)

    # additive attention mask, HF convention: (1 - mask) * -10000, kept (B,1,S)
    # and broadcast inside the kernel (never duplicated per head / query row).
    mask_add = ((1.0 - attention_mask.astype(jnp.float32)) * -10000.0
                ).reshape(B, 1, S)

    pos_padded, head_padded = encoder_and_heads(params, we, pe, te, mask_add)

    start_logits = pos_padded[:, 0].reshape(B, S)
    end_logits = pos_padded[:, 1].reshape(B, S)
    classifier_logits = head_padded[:, :NUM_LABELS]
    reg_start = head_padded[:, NUM_LABELS]
    reg_end = head_padded[:, NUM_LABELS + 1]

    return {
        "start_class": start_logits,
        "end_class": end_logits,
        "start_reg": reg_start,
        "end_reg": reg_end,
        "cls": classifier_logits,
    }


# ---------------------------------------------------------------------------
# Pure-JAX reference (same packed bf16 weights), for a loose numerical check.
# ---------------------------------------------------------------------------
def _mm(a, w):
    return jnp.dot(a.astype(jnp.bfloat16), w.astype(jnp.bfloat16),
                   preferred_element_type=jnp.float32)


def bert_qa_reference(params, input_ids, attention_mask, token_type_ids):
    B, S = input_ids.shape
    we = jnp.take(params["word_emb"], input_ids.reshape(-1), axis=0)
    pe = jnp.take(params["pos_emb"], jnp.tile(jnp.arange(S, dtype=jnp.int32), B),
                  axis=0)
    te = jnp.take(params["type_emb"], token_type_ids.reshape(-1), axis=0)
    h = _layernorm(we + pe + te, params["emb_ln_g"], params["emb_ln_b"], LN_EPS)
    mask = ((1.0 - attention_mask.astype(jnp.float32)) * -10000.0).reshape(B, 1, S)
    scale = 1.0 / math.sqrt(HEAD_DIM)

    for l in range(NUM_LAYERS):
        x = h
        qkv = _mm(x, params["qkv_w"][l]) + params["qkv_b"][l]
        qkv3 = qkv.reshape(B, S, QKV_PAD)
        ctx = []
        for hi in range(NUM_HEADS):
            off = hi * HEAD_DIM
            qh = qkv3[:, :, off:off + HEAD_DIM]
            kh = qkv3[:, :, HIDDEN + off:HIDDEN + off + HEAD_DIM]
            vh = qkv3[:, :, 2 * HIDDEN + off:2 * HIDDEN + off + HEAD_DIM]
            s = jnp.einsum("bqd,bkd->bqk", qh, kh) * scale + mask
            p = jax.nn.softmax(s, axis=-1)
            ctx.append(jnp.einsum("bqk,bkd->bqd", p, vh))
        ctx = jnp.concatenate(ctx, axis=-1).reshape(B * S, HIDDEN)
        attn = _mm(ctx, params["ao_w"][l]) + params["ao_b"][l]
        h1 = _layernorm(attn + x, params["ln1_g"][l], params["ln1_b"][l], LN_EPS)
        f = jax.nn.gelu(_mm(h1, params["ff1_w"][l]) + params["ff1_b"][l],
                        approximate=True)
        h = _layernorm(_mm(f, params["ff2_w"][l]) + params["ff2_b"][l] + h1,
                       params["ln2_g"][l], params["ln2_b"][l], LN_EPS)

    pos = _mm(h, params["pos_w"]) + params["pos_b"]
    cls_tok = h.reshape(B, S, HIDDEN)[:, 0, :]
    pooled = jnp.tanh(_mm(cls_tok, params["pool_w"]) + params["pool_b"])
    z = _mm(pooled, params["head_w"]) + params["head_b"]
    return {
        "start_class": pos[:, 0].reshape(B, S),
        "end_class": pos[:, 1].reshape(B, S),
        "start_reg": jax.nn.sigmoid(z[:, NUM_LABELS]),
        "end_reg": jax.nn.sigmoid(z[:, NUM_LABELS + 1]),
        "cls": z[:, :NUM_LABELS],
    }


# ---------------------------------------------------------------------------
# Driver
# ---------------------------------------------------------------------------
if __name__ == "__main__":
    key = jax.random.PRNGKey(0)
    k_params, k_ids, k_types = jax.random.split(key, 3)

    params = init_params(k_params)
    input_ids = jax.random.randint(k_ids, (BATCH, SEQ), 0, VOCAB, dtype=jnp.int32)
    token_type_ids = jax.random.randint(k_types, (BATCH, SEQ), 0, TYPE_VOCAB,
                                        dtype=jnp.int32)
    # partial mask to exercise the additive-mask path (last 2 tokens of batch 1)
    attention_mask = jnp.ones((BATCH, SEQ), jnp.float32).at[1, -2:].set(0.0)

    fwd = jax.jit(bert_qa_forward)
    out = jax.block_until_ready(fwd(params, input_ids, attention_mask,
                                    token_type_ids))

    assert out["start_class"].shape == (BATCH, SEQ)
    assert out["end_class"].shape == (BATCH, SEQ)
    assert out["start_reg"].shape == (BATCH,)
    assert out["end_reg"].shape == (BATCH,)
    assert out["cls"].shape == (BATCH, NUM_LABELS)
    assert all(bool(jnp.all(jnp.isfinite(v))) for v in out.values())

    # loose numerical check against the pure-JAX reference (same bf16 weights;
    # tolerance covers bf16 rounding + approx softmax reciprocal).
    ref = jax.block_until_ready(
        bert_qa_reference(params, input_ids, attention_mask, token_type_ids))
    for name in out:
        np.testing.assert_allclose(np.asarray(out[name]), np.asarray(ref[name]),
                                   rtol=3e-2, atol=3e-2, err_msg=name)

    print("KERNEL_OK")
</pallas_src>

<mosaic_0001>
module attributes {stable_mosaic.version = 11 : i64} {
  func.func @_encoder_kernel(%arg0: i32, %arg1: memref<16x32xf32, #tpu.memory_space<vmem>>, %arg2: memref<16x32xf32, #tpu.memory_space<vmem>>, %arg3: memref<16x32xf32, #tpu.memory_space<vmem>>, %arg4: memref<2x1x8xf32, #tpu.memory_space<vmem>>, %arg5: memref<1x32xf32, #tpu.memory_space<vmem>>, %arg6: memref<1x32xf32, #tpu.memory_space<vmem>>, %arg7: memref<1x32x128xbf16, #tpu.memory_space<vmem>>, %arg8: memref<1x1x128xf32, #tpu.memory_space<vmem>>, %arg9: memref<1x32x32xbf16, #tpu.memory_space<vmem>>, %arg10: memref<1x1x32xf32, #tpu.memory_space<vmem>>, %arg11: memref<1x1x32xf32, #tpu.memory_space<vmem>>, %arg12: memref<1x1x32xf32, #tpu.memory_space<vmem>>, %arg13: memref<1x32x64xbf16, #tpu.memory_space<vmem>>, %arg14: memref<1x1x64xf32, #tpu.memory_space<vmem>>, %arg15: memref<1x64x32xbf16, #tpu.memory_space<vmem>>, %arg16: memref<1x1x32xf32, #tpu.memory_space<vmem>>, %arg17: memref<1x1x32xf32, #tpu.memory_space<vmem>>, %arg18: memref<1x1x32xf32, #tpu.memory_space<vmem>>, %arg19: memref<32x32xbf16, #tpu.memory_space<vmem>>, %arg20: memref<1x32xf32, #tpu.memory_space<vmem>>, %arg21: memref<32x128xbf16, #tpu.memory_space<vmem>>, %arg22: memref<1x128xf32, #tpu.memory_space<vmem>>, %arg23: memref<32x128xbf16, #tpu.memory_space<vmem>>, %arg24: memref<1x128xf32, #tpu.memory_space<vmem>>, %arg25: memref<16x128xf32, #tpu.memory_space<vmem>>, %arg26: memref<2x128xf32, #tpu.memory_space<vmem>>, %arg27: memref<16x32xf32, #tpu.memory_space<vmem>>) attributes {dimension_semantics = [#tpu.dimension_semantics<arbitrary>], iteration_bounds = array<i64: 2>, scalar_prefetch = 0 : i64, scratch_operands = 1 : i64, tpu.core_type = #tpu.core_type<tc>, window_params = [{pipeline_mode = #tpu.pipeline_mode<synchronous>, transform_indices = @transform_0, window_bounds = array<i64: 16, 32>}, {pipeline_mode = #tpu.pipeline_mode<synchronous>, transform_indices = @transform_1, window_bounds = array<i64: 16, 32>}, {pipeline_mode = #tpu.pipeline_mode<synchronous>, transform_indices = @transform_2, window_bounds = array<i64: 16, 32>}, {pipeline_mode = #tpu.pipeline_mode<synchronous>, transform_indices = @transform_3, window_bounds = array<i64: 2, 1, 8>}, {pipeline_mode = #tpu.pipeline_mode<synchronous>, transform_indices = @transform_4, window_bounds = array<i64: 1, 32>}, {pipeline_mode = #tpu.pipeline_mode<synchronous>, transform_indices = @transform_5, window_bounds = array<i64: 1, 32>}, {transform_indices = @transform_6, window_bounds = array<i64: 1, 32, 128>}, {transform_indices = @transform_7, window_bounds = array<i64: 1, 1, 128>}, {transform_indices = @transform_8, window_bounds = array<i64: 1, 32, 32>}, {transform_indices = @transform_9, window_bounds = array<i64: 1, 1, 32>}, {transform_indices = @transform_10, window_bounds = array<i64: 1, 1, 32>}, {transform_indices = @transform_11, window_bounds = array<i64: 1, 1, 32>}, {transform_indices = @transform_12, window_bounds = array<i64: 1, 32, 64>}, {transform_indices = @transform_13, window_bounds = array<i64: 1, 1, 64>}, {transform_indices = @transform_14, window_bounds = array<i64: 1, 64, 32>}, {transform_indices = @transform_15, window_bounds = array<i64: 1, 1, 32>}, {transform_indices = @transform_16, window_bounds = array<i64: 1, 1, 32>}, {transform_indices = @transform_17, window_bounds = array<i64: 1, 1, 32>}, {pipeline_mode = #tpu.pipeline_mode<synchronous>, transform_indices = @transform_18, window_bounds = array<i64: 32, 32>}, {pipeline_mode = #tpu.pipeline_mode<synchronous>, transform_indices = @transform_19, window_bounds = array<i64: 1, 32>}, {pipeline_mode = #tpu.pipeline_mode<synchronous>, transform_indices = @transform_20, window_bounds = array<i64: 32, 128>}, {pipeline_mode = #tpu.pipeline_mode<synchronous>, transform_indices = @transform_21, window_bounds = array<i64: 1, 128>}, {pipeline_mode = #tpu.pipeline_mode<synchronous>, transform_indices = @transform_22, window_bounds = array<i64: 32, 128>}, {pipeline_mode = #tpu.pipeline_mode<synchronous>, transform_indices = @transform_23, window_bounds = array<i64: 1, 128>}, {pipeline_mode = #tpu.pipeline_mode<synchronous>, transform_indices = @transform_24, window_bounds = array<i64: 16, 128>}, {pipeline_mode = #tpu.pipeline_mode<synchronous>, transform_indices = @transform_25, window_bounds = array<i64: 2, 128>}]} {
    %c0_i32 = arith.constant 0 : i32
    %0 = arith.cmpi eq, %arg0, %c0_i32 : i32
    %1 = arith.extui %0 : i1 to i32
    %c0_i32_0 = arith.constant 0 : i32
    %2 = arith.cmpi ne, %1, %c0_i32_0 : i32
    scf.if %2 {
      %c0_71 = arith.constant 0 : index
      %c0_72 = arith.constant 0 : index
      %152 = vector.load %arg1[%c0_71, %c0_72] : memref<16x32xf32, #tpu.memory_space<vmem>>, vector<16x32xf32>
      %c0_73 = arith.constant 0 : index
      %c0_74 = arith.constant 0 : index
      %153 = vector.load %arg2[%c0_73, %c0_74] : memref<16x32xf32, #tpu.memory_space<vmem>>, vector<16x32xf32>
      %154 = arith.addf %152, %153 : vector<16x32xf32>
      %c0_75 = arith.constant 0 : index
      %c0_76 = arith.constant 0 : index
      %155 = vector.load %arg3[%c0_75, %c0_76] : memref<16x32xf32, #tpu.memory_space<vmem>>, vector<16x32xf32>
      %156 = arith.addf %154, %155 : vector<16x32xf32>
      %c0_77 = arith.constant 0 : index
      %c0_78 = arith.constant 0 : index
      %157 = vector.load %arg5[%c0_77, %c0_78] : memref<1x32xf32, #tpu.memory_space<vmem>>, vector<1x32xf32>
      %c0_79 = arith.constant 0 : index
      %c0_80 = arith.constant 0 : index
      %158 = vector.load %arg6[%c0_79, %c0_80] : memref<1x32xf32, #tpu.memory_space<vmem>>, vector<1x32xf32>
      %cst_81 = arith.constant dense<0.000000e+00> : vector<16xf32>
      %159 = vector.multi_reduction <add>, %156, %cst_81 [1] : vector<16x32xf32> to vector<16xf32>
      %160 = vector.shape_cast %159 : vector<16xf32> to vector<16x1xf32>
      %cst_82 = arith.constant 3.200000e+01 : f32
      %161 = vector.broadcast %cst_82 : f32 to vector<16x1xf32>
      %162 = arith.divf %160, %161 : vector<16x1xf32>
      %163 = vector.broadcast %162 : vector<16x1xf32> to vector<16x32xf32>
      %164 = arith.subf %156, %163 : vector<16x32xf32>
      %165 = arith.mulf %164, %164 : vector<16x32xf32>
      %cst_83 = arith.constant dense<0.000000e+00> : vector<16xf32>
      %166 = vector.multi_reduction <add>, %165, %cst_83 [1] : vector<16x32xf32> to vector<16xf32>
      %167 = vector.shape_cast %166 : vector<16xf32> to vector<16x1xf32>
      %cst_84 = arith.constant 3.200000e+01 : f32
      %168 = vector.broadcast %cst_84 : f32 to vector<16x1xf32>
      %169 = arith.divf %167, %168 : vector<16x1xf32>
      %170 = vector.broadcast %162 : vector<16x1xf32> to vector<16x32xf32>
      %171 = arith.subf %156, %170 : vector<16x32xf32>
      %cst_85 = arith.constant 9.99999996E-13 : f32
      %172 = vector.broadcast %cst_85 : f32 to vector<16x1xf32>
      %173 = arith.addf %169, %172 : vector<16x1xf32>
      %174 = math.rsqrt %173 : vector<16x1xf32>
      %175 = vector.broadcast %174 : vector<16x1xf32> to vector<16x32xf32>
      %176 = arith.mulf %171, %175 : vector<16x32xf32>
      %177 = vector.broadcast %157 : vector<1x32xf32> to vector<16x32xf32>
      %178 = arith.mulf %176, %177 : vector<16x32xf32>
      %179 = vector.broadcast %158 : vector<1x32xf32> to vector<16x32xf32>
      %180 = arith.addf %178, %179 : vector<16x32xf32>
      %c0_86 = arith.constant 0 : index
      %c0_87 = arith.constant 0 : index
      %181 = vector.load %arg27[%c0_86, %c0_87] : memref<16x32xf32, #tpu.memory_space<vmem>>, vector<16x32xf32>
      tpu.vector_store %arg27[%c0_86, %c0_87], %180 {strides = array<i32>} : memref<16x32xf32, #tpu.memory_space<vmem>>, vector<16x32xf32>,
    } else {
    }
    %c0 = arith.constant 0 : index
    %c0_1 = arith.constant 0 : index
    %3 = vector.load %arg27[%c0, %c0_1] : memref<16x32xf32, #tpu.memory_space<vmem>>, vector<16x32xf32>
    %4 = arith.truncf %3 : vector<16x32xf32> to vector<16x32xbf16>
    %c0_2 = arith.constant 0 : index
    %c0_3 = arith.constant 0 : index
    %c0_4 = arith.constant 0 : index
    %5 = vector.load %arg7[%c0_2, %c0_3, %c0_4] : memref<1x32x128xbf16, #tpu.memory_space<vmem>>, vector<1x32x128xbf16>
    %6 = vector.shape_cast %5 : vector<1x32x128xbf16> to vector<32x128xbf16>
    %cst = arith.constant dense<0.000000e+00> : vector<16x128xf32>
    %7 = tpu.matmul %4, %6, %cst {dimension_numbers = #tpu.dot_dimension_numbers<[1], [0], [0], [1], [0, 0, 1, 1], [], []>} : vector<16x32xbf16>, vector<32x128xbf16>, vector<16x128xf32> -> vector<16x128xf32>
    %c0_5 = arith.constant 0 : index
    %c0_6 = arith.constant 0 : index
    %c0_7 = arith.constant 0 : index
    %8 = vector.load %arg8[%c0_5, %c0_6, %c0_7] : memref<1x1x128xf32, #tpu.memory_space<vmem>>, vector<1x1x128xf32>
    %9 = vector.shape_cast %8 : vector<1x1x128xf32> to vector<1x128xf32>
    %10 = vector.broadcast %9 : vector<1x128xf32> to vector<16x128xf32>
    %11 = arith.addf %7, %10 : vector<16x128xf32>
    %12 = arith.truncf %11 : vector<16x128xf32> to vector<16x128xbf16>
    %13 = vector.shape_cast %12 : vector<16x128xbf16> to vector<2x8x128xbf16>
    %c0_8 = arith.constant 0 : index
    %c0_9 = arith.constant 0 : index
    %c0_10 = arith.constant 0 : index
    %14 = vector.load %arg4[%c0_8, %c0_9, %c0_10] : memref<2x1x8xf32, #tpu.memory_space<vmem>>, vector<2x1x8xf32>
    %15 = vector.extract_strided_slice %13 {offsets = [0, 0, 0], sizes = [2, 8, 16], strides = [1, 1, 1]} : vector<2x8x128xbf16> to vector<2x8x16xbf16>
    %16 = vector.extract_strided_slice %13 {offsets = [0, 0, 32], sizes = [2, 8, 16], strides = [1, 1, 1]} : vector<2x8x128xbf16> to vector<2x8x16xbf16>
    %17 = vector.extract_strided_slice %13 {offsets = [0, 0, 64], sizes = [2, 8, 16], strides = [1, 1, 1]} : vector<2x8x128xbf16> to vector<2x8x16xbf16>
    "tpu.trace_start"() <{level = 10 : i32, message = "bqd,bkd->bqk"}> : () -> ()
    %cst_11 = arith.constant dense<0.000000e+00> : vector<2x8x8xf32>
    %18 = tpu.matmul %15, %16, %cst_11 {dimension_numbers = #tpu.dot_dimension_numbers<[2], [2], [1], [1], [0, 0, 0, 1, 1, 1], [0], [0]>} : vector<2x8x16xbf16>, vector<2x8x16xbf16>, vector<2x8x8xf32> -> vector<2x8x8xf32>
    "tpu.trace_stop"() : () -> ()
    %cst_12 = arith.constant 2.500000e-01 : f32
    %19 = vector.broadcast %cst_12 : f32 to vector<2x8x8xf32>
    %20 = arith.mulf %18, %19 : vector<2x8x8xf32>
    %21 = vector.broadcast %14 : vector<2x1x8xf32> to vector<2x8x8xf32>
    %22 = arith.addf %20, %21 : vector<2x8x8xf32>
    %cst_13 = arith.constant dense<0xFF800000> : vector<2x8xf32>
    %23 = vector.multi_reduction <maximumf>, %22, %cst_13 [2] : vector<2x8x8xf32> to vector<2x8xf32>
    %24 = vector.shape_cast %23 : vector<2x8xf32> to vector<2x8x1xf32>
    %25 = vector.broadcast %24 : vector<2x8x1xf32> to vector<2x8x8xf32>
    %26 = arith.subf %22, %25 : vector<2x8x8xf32>
    %27 = math.exp %26 : vector<2x8x8xf32>
    %cst_14 = arith.constant dense<0.000000e+00> : vector<2x8xf32>
    %28 = vector.multi_reduction <add>, %27, %cst_14 [2] : vector<2x8x8xf32> to vector<2x8xf32>
    %29 = vector.shape_cast %28 : vector<2x8xf32> to vector<2x8x1xf32>
    %30 = tpu.reciprocal %29 {approx = true} : vector<2x8x1xf32> -> vector<2x8x1xf32>
    %31 = vector.broadcast %30 : vector<2x8x1xf32> to vector<2x8x8xf32>
    %32 = arith.mulf %27, %31 : vector<2x8x8xf32>
    %33 = arith.truncf %32 : vector<2x8x8xf32> to vector<2x8x8xbf16>
    "tpu.trace_start"() <{level = 10 : i32, message = "bqk,bkd->bqd"}> : () -> ()
    %cst_15 = arith.constant dense<0.000000e+00> : vector<2x8x16xf32>
    %34 = tpu.matmul %33, %17, %cst_15 {dimension_numbers = #tpu.dot_dimension_numbers<[2], [1], [1], [2], [0, 0, 0, 1, 1, 2], [0], [0]>} : vector<2x8x8xbf16>, vector<2x8x16xbf16>, vector<2x8x16xf32> -> vector<2x8x16xf32>
    "tpu.trace_stop"() : () -> ()
    %35 = vector.extract_strided_slice %13 {offsets = [0, 0, 16], sizes = [2, 8, 16], strides = [1, 1, 1]} : vector<2x8x128xbf16> to vector<2x8x16xbf16>
    %36 = vector.extract_strided_slice %13 {offsets = [0, 0, 48], sizes = [2, 8, 16], strides = [1, 1, 1]} : vector<2x8x128xbf16> to vector<2x8x16xbf16>
    %37 = vector.extract_strided_slice %13 {offsets = [0, 0, 80], sizes = [2, 8, 16], strides = [1, 1, 1]} : vector<2x8x128xbf16> to vector<2x8x16xbf16>
    "tpu.trace_start"() <{level = 10 : i32, message = "bqd,bkd->bqk"}> : () -> ()
    %cst_16 = arith.constant dense<0.000000e+00> : vector<2x8x8xf32>
    %38 = tpu.matmul %35, %36, %cst_16 {dimension_numbers = #tpu.dot_dimension_numbers<[2], [2], [1], [1], [0, 0, 0, 1, 1, 1], [0], [0]>} : vector<2x8x16xbf16>, vector<2x8x16xbf16>, vector<2x8x8xf32> -> vector<2x8x8xf32>
    "tpu.trace_stop"() : () -> ()
    %cst_17 = arith.constant 2.500000e-01 : f32
    %39 = vector.broadcast %cst_17 : f32 to vector<2x8x8xf32>
    %40 = arith.mulf %38, %39 : vector<2x8x8xf32>
    %41 = vector.broadcast %14 : vector<2x1x8xf32> to vector<2x8x8xf32>
    %42 = arith.addf %40, %41 : vector<2x8x8xf32>
    %cst_18 = arith.constant dense<0xFF800000> : vector<2x8xf32>
    %43 = vector.multi_reduction <maximumf>, %42, %cst_18 [2] : vector<2x8x8xf32> to vector<2x8xf32>
    %44 = vector.shape_cast %43 : vector<2x8xf32> to vector<2x8x1xf32>
    %45 = vector.broadcast %44 : vector<2x8x1xf32> to vector<2x8x8xf32>
    %46 = arith.subf %42, %45 : vector<2x8x8xf32>
    %47 = math.exp %46 : vector<2x8x8xf32>
    %cst_19 = arith.constant dense<0.000000e+00> : vector<2x8xf32>
    %48 = vector.multi_reduction <add>, %47, %cst_19 [2] : vector<2x8x8xf32> to vector<2x8xf32>
    %49 = vector.shape_cast %48 : vector<2x8xf32> to vector<2x8x1xf32>
    %50 = tpu.reciprocal %49 {approx = true} : vector<2x8x1xf32> -> vector<2x8x1xf32>
    %51 = vector.broadcast %50 : vector<2x8x1xf32> to vector<2x8x8xf32>
    %52 = arith.mulf %47, %51 : vector<2x8x8xf32>
    %53 = arith.truncf %52 : vector<2x8x8xf32> to vector<2x8x8xbf16>
    "tpu.trace_start"() <{level = 10 : i32, message = "bqk,bkd->bqd"}> : () -> ()
    %cst_20 = arith.constant dense<0.000000e+00> : vector<2x8x16xf32>
    %54 = tpu.matmul %53, %37, %cst_20 {dimension_numbers = #tpu.dot_dimension_numbers<[2], [1], [1], [2], [0, 0, 0, 1, 1, 2], [0], [0]>} : vector<2x8x8xbf16>, vector<2x8x16xbf16>, vector<2x8x16xf32> -> vector<2x8x16xf32>
    "tpu.trace_stop"() : () -> ()
    %55 = tpu.concatenate %34, %54 in 2 : vector<2x8x16xf32>, vector<2x8x16xf32> -> vector<2x8x32xf32>
    %56 = vector.shape_cast %55 : vector<2x8x32xf32> to vector<16x32xf32>
    %57 = arith.truncf %56 : vector<16x32xf32> to vector<16x32xbf16>
    %c0_21 = arith.constant 0 : index
    %c0_22 = arith.constant 0 : index
    %c0_23 = arith.constant 0 : index
    %58 = vector.load %arg9[%c0_21, %c0_22, %c0_23] : memref<1x32x32xbf16, #tpu.memory_space<vmem>>, vector<1x32x32xbf16>
    %59 = vector.shape_cast %58 : vector<1x32x32xbf16> to vector<32x32xbf16>
    %cst_24 = arith.constant dense<0.000000e+00> : vector<16x32xf32>
    %60 = tpu.matmul %57, %59, %cst_24 {dimension_numbers = #tpu.dot_dimension_numbers<[1], [0], [0], [1], [0, 0, 1, 1], [], []>} : vector<16x32xbf16>, vector<32x32xbf16>, vector<16x32xf32> -> vector<16x32xf32>
    %c0_25 = arith.constant 0 : index
    %c0_26 = arith.constant 0 : index
    %c0_27 = arith.constant 0 : index
    %61 = vector.load %arg10[%c0_25, %c0_26, %c0_27] : memref<1x1x32xf32, #tpu.memory_space<vmem>>, vector<1x1x32xf32>
    %62 = vector.shape_cast %61 : vector<1x1x32xf32> to vector<1x32xf32>
    %63 = vector.broadcast %62 : vector<1x32xf32> to vector<16x32xf32>
    %64 = arith.addf %60, %63 : vector<16x32xf32>
    %65 = arith.addf %64, %3 : vector<16x32xf32>
    %c0_28 = arith.constant 0 : index
    %c0_29 = arith.constant 0 : index
    %c0_30 = arith.constant 0 : index
    %66 = vector.load %arg11[%c0_28, %c0_29, %c0_30] : memref<1x1x32xf32, #tpu.memory_space<vmem>>, vector<1x1x32xf32>
    %67 = vector.shape_cast %66 : vector<1x1x32xf32> to vector<1x32xf32>
    %c0_31 = arith.constant 0 : index
    %c0_32 = arith.constant 0 : index
    %c0_33 = arith.constant 0 : index
    %68 = vector.load %arg12[%c0_31, %c0_32, %c0_33] : memref<1x1x32xf32, #tpu.memory_space<vmem>>, vector<1x1x32xf32>
    %69 = vector.shape_cast %68 : vector<1x1x32xf32> to vector<1x32xf32>
    %cst_34 = arith.constant dense<0.000000e+00> : vector<16xf32>
    %70 = vector.multi_reduction <add>, %65, %cst_34 [1] : vector<16x32xf32> to vector<16xf32>
    %71 = vector.shape_cast %70 : vector<16xf32> to vector<16x1xf32>
    %cst_35 = arith.constant 3.200000e+01 : f32
    %72 = vector.broadcast %cst_35 : f32 to vector<16x1xf32>
    %73 = arith.divf %71, %72 : vector<16x1xf32>
    %74 = vector.broadcast %73 : vector<16x1xf32> to vector<16x32xf32>
    %75 = arith.subf %65, %74 : vector<16x32xf32>
    %76 = arith.mulf %75, %75 : vector<16x32xf32>
    %cst_36 = arith.constant dense<0.000000e+00> : vector<16xf32>
    %77 = vector.multi_reduction <add>, %76, %cst_36 [1] : vector<16x32xf32> to vector<16xf32>
    %78 = vector.shape_cast %77 : vector<16xf32> to vector<16x1xf32>
    %cst_37 = arith.constant 3.200000e+01 : f32
    %79 = vector.broadcast %cst_37 : f32 to vector<16x1xf32>
    %80 = arith.divf %78, %79 : vector<16x1xf32>
    %81 = vector.broadcast %73 : vector<16x1xf32> to vector<16x32xf32>
    %82 = arith.subf %65, %81 : vector<16x32xf32>
    %cst_38 = arith.constant 9.99999996E-13 : f32
    %83 = vector.broadcast %cst_38 : f32 to vector<16x1xf32>
    %84 = arith.addf %80, %83 : vector<16x1xf32>
    %85 = math.rsqrt %84 : vector<16x1xf32>
    %86 = vector.broadcast %85 : vector<16x1xf32> to vector<16x32xf32>
    %87 = arith.mulf %82, %86 : vector<16x32xf32>
    %88 = vector.broadcast %67 : vector<1x32xf32> to vector<16x32xf32>
    %89 = arith.mulf %87, %88 : vector<16x32xf32>
    %90 = vector.broadcast %69 : vector<1x32xf32> to vector<16x32xf32>
    %91 = arith.addf %89, %90 : vector<16x32xf32>
    %92 = arith.truncf %91 : vector<16x32xf32> to vector<16x32xbf16>
    %c0_39 = arith.constant 0 : index
    %c0_40 = arith.constant 0 : index
    %c0_41 = arith.constant 0 : index
    %93 = vector.load %arg13[%c0_39, %c0_40, %c0_41] : memref<1x32x64xbf16, #tpu.memory_space<vmem>>, vector<1x32x64xbf16>
    %94 = vector.shape_cast %93 : vector<1x32x64xbf16> to vector<32x64xbf16>
    %cst_42 = arith.constant dense<0.000000e+00> : vector<16x64xf32>
    %95 = tpu.matmul %92, %94, %cst_42 {dimension_numbers = #tpu.dot_dimension_numbers<[1], [0], [0], [1], [0, 0, 1, 1], [], []>} : vector<16x32xbf16>, vector<32x64xbf16>, vector<16x64xf32> -> vector<16x64xf32>
    %c0_43 = arith.constant 0 : index
    %c0_44 = arith.constant 0 : index
    %c0_45 = arith.constant 0 : index
    %96 = vector.load %arg14[%c0_43, %c0_44, %c0_45] : memref<1x1x64xf32, #tpu.memory_space<vmem>>, vector<1x1x64xf32>
    %97 = vector.shape_cast %96 : vector<1x1x64xf32> to vector<1x64xf32>
    %98 = vector.broadcast %97 : vector<1x64xf32> to vector<16x64xf32>
    %99 = arith.addf %95, %98 : vector<16x64xf32>
    %100 = arith.mulf %99, %99 : vector<16x64xf32>
    %101 = arith.mulf %99, %100 : vector<16x64xf32>
    %cst_46 = arith.constant 4.471500e-02 : f32
    %102 = vector.broadcast %cst_46 : f32 to vector<16x64xf32>
    %103 = arith.mulf %102, %101 : vector<16x64xf32>
    %104 = arith.addf %99, %103 : vector<16x64xf32>
    %cst_47 = arith.constant 0.797884583 : f32
    %105 = vector.broadcast %cst_47 : f32 to vector<16x64xf32>
    %106 = arith.mulf %105, %104 : vector<16x64xf32>
    %107 = math.tanh %106 : vector<16x64xf32>
    %cst_48 = arith.constant 1.000000e+00 : f32
    %108 = vector.broadcast %cst_48 : f32 to vector<16x64xf32>
    %109 = arith.addf %108, %107 : vector<16x64xf32>
    %cst_49 = arith.constant 5.000000e-01 : f32
    %110 = vector.broadcast %cst_49 : f32 to vector<16x64xf32>
    %111 = arith.mulf %110, %109 : vector<16x64xf32>
    %112 = arith.mulf %99, %111 : vector<16x64xf32>
    %113 = arith.truncf %112 : vector<16x64xf32> to vector<16x64xbf16>
    %c0_50 = arith.constant 0 : index
    %c0_51 = arith.constant 0 : index
    %c0_52 = arith.constant 0 : index
    %114 = vector.load %arg15[%c0_50, %c0_51, %c0_52] : memref<1x64x32xbf16, #tpu.memory_space<vmem>>, vector<1x64x32xbf16>
    %115 = vector.shape_cast %114 : vector<1x64x32xbf16> to vector<64x32xbf16>
    %cst_53 = arith.constant dense<0.000000e+00> : vector<16x32xf32>
    %116 = tpu.matmul %113, %115, %cst_53 {dimension_numbers = #tpu.dot_dimension_numbers<[1], [0], [0], [1], [0, 0, 1, 1], [], []>} : vector<16x64xbf16>, vector<64x32xbf16>, vector<16x32xf32> -> vector<16x32xf32>
    %c0_54 = arith.constant 0 : index
    %c0_55 = arith.constant 0 : index
    %c0_56 = arith.constant 0 : index
    %117 = vector.load %arg16[%c0_54, %c0_55, %c0_56] : memref<1x1x32xf32, #tpu.memory_space<vmem>>, vector<1x1x32xf32>
    %118 = vector.shape_cast %117 : vector<1x1x32xf32> to vector<1x32xf32>
    %119 = vector.broadcast %118 : vector<1x32xf32> to vector<16x32xf32>
    %120 = arith.addf %116, %119 : vector<16x32xf32>
    %121 = arith.addf %120, %91 : vector<16x32xf32>
    %c0_57 = arith.constant 0 : index
    %c0_58 = arith.constant 0 : index
    %c0_59 = arith.constant 0 : index
    %122 = vector.load %arg17[%c0_57, %c0_58, %c0_59] : memref<1x1x32xf32, #tpu.memory_space<vmem>>, vector<1x1x32xf32>
    %123 = vector.shape_cast %122 : vector<1x1x32xf32> to vector<1x32xf32>
    %c0_60 = arith.constant 0 : index
    %c0_61 = arith.constant 0 : index
    %c0_62 = arith.constant 0 : index
    %124 = vector.load %arg18[%c0_60, %c0_61, %c0_62] : memref<1x1x32xf32, #tpu.memory_space<vmem>>, vector<1x1x32xf32>
    %125 = vector.shape_cast %124 : vector<1x1x32xf32> to vector<1x32xf32>
    %cst_63 = arith.constant dense<0.000000e+00> : vector<16xf32>
    %126 = vector.multi_reduction <add>, %121, %cst_63 [1] : vector<16x32xf32> to vector<16xf32>
    %127 = vector.shape_cast %126 : vector<16xf32> to vector<16x1xf32>
    %cst_64 = arith.constant 3.200000e+01 : f32
    %128 = vector.broadcast %cst_64 : f32 to vector<16x1xf32>
    %129 = arith.divf %127, %128 : vector<16x1xf32>
    %130 = vector.broadcast %129 : vector<16x1xf32> to vector<16x32xf32>
    %131 = arith.subf %121, %130 : vector<16x32xf32>
    %132 = arith.mulf %131, %131 : vector<16x32xf32>
    %cst_65 = arith.constant dense<0.000000e+00> : vector<16xf32>
    %133 = vector.multi_reduction <add>, %132, %cst_65 [1] : vector<16x32xf32> to vector<16xf32>
    %134 = vector.shape_cast %133 : vector<16xf32> to vector<16x1xf32>
    %cst_66 = arith.constant 3.200000e+01 : f32
    %135 = vector.broadcast %cst_66 : f32 to vector<16x1xf32>
    %136 = arith.divf %134, %135 : vector<16x1xf32>
    %137 = vector.broadcast %129 : vector<16x1xf32> to vector<16x32xf32>
    %138 = arith.subf %121, %137 : vector<16x32xf32>
    %cst_67 = arith.constant 9.99999996E-13 : f32
    %139 = vector.broadcast %cst_67 : f32 to vector<16x1xf32>
    %140 = arith.addf %136, %139 : vector<16x1xf32>
    %141 = math.rsqrt %140 : vector<16x1xf32>
    %142 = vector.broadcast %141 : vector<16x1xf32> to vector<16x32xf32>
    %143 = arith.mulf %138, %142 : vector<16x32xf32>
    %144 = vector.broadcast %123 : vector<1x32xf32> to vector<16x32xf32>
    %145 = arith.mulf %143, %144 : vector<16x32xf32>
    %146 = vector.broadcast %125 : vector<1x32xf32> to vector<16x32xf32>
    %147 = arith.addf %145, %146 : vector<16x32xf32>
    %c0_68 = arith.constant 0 : index
    %c0_69 = arith.constant 0 : index
    %148 = vector.load %arg27[%c0_68, %c0_69] : memref<16x32xf32, #tpu.memory_space<vmem>>, vector<16x32xf32>
    tpu.vector_store %arg27[%c0_68, %c0_69], %147 {strides = array<i32>} : memref<16x32xf32, #tpu.memory_space<vmem>>, vector<16x32xf32>,
    %c1_i32 = arith.constant 1 : i32
    %149 = arith.cmpi eq, %arg0, %c1_i32 : i32
    %150 = arith.extui %149 : i1 to i32
    %c0_i32_70 = arith.constant 0 : i32
    %151 = arith.cmpi ne, %150, %c0_i32_70 : i32
    scf.if %151 {
      %152 = arith.truncf %147 : vector<16x32xf32> to vector<16x32xbf16>
      %c0_71 = arith.constant 0 : index
      %c0_72 = arith.constant 0 : index
      %153 = vector.load %arg21[%c0_71, %c0_72] : memref<32x128xbf16, #tpu.memory_space<vmem>>, vector<32x128xbf16>
      %cst_73 = arith.constant dense<0.000000e+00> : vector<16x128xf32>
      %154 = tpu.matmul %152, %153, %cst_73 {dimension_numbers = #tpu.dot_dimension_numbers<[1], [0], [0], [1], [0, 0, 1, 1], [], []>} : vector<16x32xbf16>, vector<32x128xbf16>, vector<16x128xf32> -> vector<16x128xf32>
      %c0_74 = arith.constant 0 : index
      %c0_75 = arith.constant 0 : index
      %155 = vector.load %arg22[%c0_74, %c0_75] : memref<1x128xf32, #tpu.memory_space<vmem>>, vector<1x128xf32>
      %156 = vector.broadcast %155 : vector<1x128xf32> to vector<16x128xf32>
      %157 = arith.addf %154, %156 : vector<16x128xf32>
      %c0_76 = arith.constant 0 : index
      %c0_77 = arith.constant 0 : index
      %158 = vector.load %arg25[%c0_76, %c0_77] : memref<16x128xf32, #tpu.memory_space<vmem>>, vector<16x128xf32>
      tpu.vector_store %arg25[%c0_76, %c0_77], %157 {strides = array<i32>} : memref<16x128xf32, #tpu.memory_space<vmem>>, vector<16x128xf32>,
      %159 = vector.shape_cast %147 : vector<16x32xf32> to vector<2x8x32xf32>
      %160 = vector.extract_strided_slice %159 {offsets = [0, 0, 0], sizes = [2, 1, 32], strides = [1, 1, 1]} : vector<2x8x32xf32> to vector<2x1x32xf32>
      %161 = vector.shape_cast %160 : vector<2x1x32xf32> to vector<2x32xf32>
      %162 = arith.truncf %161 : vector<2x32xf32> to vector<2x32xbf16>
      %c0_78 = arith.constant 0 : index
      %c0_79 = arith.constant 0 : index
      %163 = vector.load %arg19[%c0_78, %c0_79] : memref<32x32xbf16, #tpu.memory_space<vmem>>, vector<32x32xbf16>
      %cst_80 = arith.constant dense<0.000000e+00> : vector<2x32xf32>
      %164 = tpu.matmul %162, %163, %cst_80 {dimension_numbers = #tpu.dot_dimension_numbers<[1], [0], [0], [1], [0, 0, 1, 1], [], []>} : vector<2x32xbf16>, vector<32x32xbf16>, vector<2x32xf32> -> vector<2x32xf32>
      %c0_81 = arith.constant 0 : index
      %c0_82 = arith.constant 0 : index
      %165 = vector.load %arg20[%c0_81, %c0_82] : memref<1x32xf32, #tpu.memory_space<vmem>>, vector<1x32xf32>
      %166 = vector.broadcast %165 : vector<1x32xf32> to vector<2x32xf32>
      %167 = arith.addf %164, %166 : vector<2x32xf32>
      %168 = math.tanh %167 : vector<2x32xf32>
      %169 = arith.truncf %168 : vector<2x32xf32> to vector<2x32xbf16>
      %c0_83 = arith.constant 0 : index
      %c0_84 = arith.constant 0 : index
      %170 = vector.load %arg23[%c0_83, %c0_84] : memref<32x128xbf16, #tpu.memory_space<vmem>>, vector<32x128xbf16>
      %cst_85 = arith.constant dense<0.000000e+00> : vector<2x128xf32>
      %171 = tpu.matmul %169, %170, %cst_85 {dimension_numbers = #tpu.dot_dimension_numbers<[1], [0], [0], [1], [0, 0, 1, 1], [], []>} : vector<2x32xbf16>, vector<32x128xbf16>, vector<2x128xf32> -> vector<2x128xf32>
      %c0_86 = arith.constant 0 : index
      %c0_87 = arith.constant 0 : index
      %172 = vector.load %arg24[%c0_86, %c0_87] : memref<1x128xf32, #tpu.memory_space<vmem>>, vector<1x128xf32>
      %173 = vector.broadcast %172 : vector<1x128xf32> to vector<2x128xf32>
      %174 = arith.addf %171, %173 : vector<2x128xf32>
      %175 = tpu.iota {dimensions = array<i32: 1>} : vector<2x128xi32>
      %c3_i32 = arith.constant 3 : i32
      %176 = vector.broadcast %c3_i32 : i32 to vector<2x128xi32>
      %177 = arith.cmpi sge, %175, %176 : vector<2x128xi32>
      %c5_i32 = arith.constant 5 : i32
      %178 = vector.broadcast %c5_i32 : i32 to vector<2x128xi32>
      %179 = arith.cmpi slt, %175, %178 : vector<2x128xi32>
      %180 = arith.andi %177, %179 : vector<2x128xi1>
      %181 = arith.negf %174 : vector<2x128xf32>
      %182 = math.exp %181 : vector<2x128xf32>
      %cst_88 = arith.constant 1.000000e+00 : f32
      %183 = vector.broadcast %cst_88 : f32 to vector<2x128xf32>
      %184 = arith.addf %183, %182 : vector<2x128xf32>
      %185 = arith.divf %183, %184 : vector<2x128xf32>
      %186 = arith.select %180, %185, %174 : vector<2x128xi1>, vector<2x128xf32>
      %c0_89 = arith.constant 0 : index
      %c0_90 = arith.constant 0 : index
      %187 = vector.load %arg26[%c0_89, %c0_90] : memref<2x128xf32, #tpu.memory_space<vmem>>, vector<2x128xf32>
      tpu.vector_store %arg26[%c0_89, %c0_90], %186 {strides = array<i32>} : memref<2x128xf32, #tpu.memory_space<vmem>>, vector<2x128xf32>,
    } else {
    }
    return
  }
  func.func @transform_0(%arg0: i32) -> (i32, i32) {
    %c0_i32 = arith.constant 0 : i32
    %c0_i32_0 = arith.constant 0 : i32
    %c0_i32_1 = arith.constant 0 : i32
    return %c0_i32, %c0_i32_0 : i32, i32
  }
  func.func @transform_1(%arg0: i32) -> (i32, i32) {
    %c0_i32 = arith.constant 0 : i32
    %c0_i32_0 = arith.constant 0 : i32
    %c0_i32_1 = arith.constant 0 : i32
    return %c0_i32, %c0_i32_0 : i32, i32
  }
  func.func @transform_2(%arg0: i32) -> (i32, i32) {
    %c0_i32 = arith.constant 0 : i32
    %c0_i32_0 = arith.constant 0 : i32
    %c0_i32_1 = arith.constant 0 : i32
    return %c0_i32, %c0_i32_0 : i32, i32
  }
  func.func @transform_3(%arg0: i32) -> (i32, i32, i32) {
    %c0_i32 = arith.constant 0 : i32
    %c0_i32_0 = arith.constant 0 : i32
    %c0_i32_1 = arith.constant 0 : i32
    %c0_i32_2 = arith.constant 0 : i32
    return %c0_i32, %c0_i32_0, %c0_i32_1 : i32, i32, i32
  }
  func.func @transform_4(%arg0: i32) -> (i32, i32) {
    %c0_i32 = arith.constant 0 : i32
    %c0_i32_0 = arith.constant 0 : i32
    %c0_i32_1 = arith.constant 0 : i32
    return %c0_i32, %c0_i32_0 : i32, i32
  }
  func.func @transform_5(%arg0: i32) -> (i32, i32) {
    %c0_i32 = arith.constant 0 : i32
    %c0_i32_0 = arith.constant 0 : i32
    %c0_i32_1 = arith.constant 0 : i32
    return %c0_i32, %c0_i32_0 : i32, i32
  }
  func.func @transform_6(%arg0: i32) -> (i32, i32, i32) {
    %c0_i32 = arith.constant 0 : i32
    %c0_i32_0 = arith.constant 0 : i32
    %c0_i32_1 = arith.constant 0 : i32
    return %arg0, %c0_i32, %c0_i32_0 : i32, i32, i32
  }
  func.func @transform_7(%arg0: i32) -> (i32, i32, i32) {
    %c0_i32 = arith.constant 0 : i32
    %c0_i32_0 = arith.constant 0 : i32
    %c0_i32_1 = arith.constant 0 : i32
    return %arg0, %c0_i32, %c0_i32_0 : i32, i32, i32
  }
  func.func @transform_8(%arg0: i32) -> (i32, i32, i32) {
    %c0_i32 = arith.constant 0 : i32
    %c0_i32_0 = arith.constant 0 : i32
    %c0_i32_1 = arith.constant 0 : i32
    return %arg0, %c0_i32, %c0_i32_0 : i32, i32, i32
  }
  func.func @transform_9(%arg0: i32) -> (i32, i32, i32) {
    %c0_i32 = arith.constant 0 : i32
    %c0_i32_0 = arith.constant 0 : i32
    %c0_i32_1 = arith.constant 0 : i32
    return %arg0, %c0_i32, %c0_i32_0 : i32, i32, i32
  }
  func.func @transform_10(%arg0: i32) -> (i32, i32, i32) {
    %c0_i32 = arith.constant 0 : i32
    %c0_i32_0 = arith.constant 0 : i32
    %c0_i32_1 = arith.constant 0 : i32
    return %arg0, %c0_i32, %c0_i32_0 : i32, i32, i32
  }
  func.func @transform_11(%arg0: i32) -> (i32, i32, i32) {
    %c0_i32 = arith.constant 0 : i32
    %c0_i32_0 = arith.constant 0 : i32
    %c0_i32_1 = arith.constant 0 : i32
    return %arg0, %c0_i32, %c0_i32_0 : i32, i32, i32
  }
  func.func @transform_12(%arg0: i32) -> (i32, i32, i32) {
    %c0_i32 = arith.constant 0 : i32
    %c0_i32_0 = arith.constant 0 : i32
    %c0_i32_1 = arith.constant 0 : i32
    return %arg0, %c0_i32, %c0_i32_0 : i32, i32, i32
  }
  func.func @transform_13(%arg0: i32) -> (i32, i32, i32) {
    %c0_i32 = arith.constant 0 : i32
    %c0_i32_0 = arith.constant 0 : i32
    %c0_i32_1 = arith.constant 0 : i32
    return %arg0, %c0_i32, %c0_i32_0 : i32, i32, i32
  }
  func.func @transform_14(%arg0: i32) -> (i32, i32, i32) {
    %c0_i32 = arith.constant 0 : i32
    %c0_i32_0 = arith.constant 0 : i32
    %c0_i32_1 = arith.constant 0 : i32
    return %arg0, %c0_i32, %c0_i32_0 : i32, i32, i32
  }
  func.func @transform_15(%arg0: i32) -> (i32, i32, i32) {
    %c0_i32 = arith.constant 0 : i32
    %c0_i32_0 = arith.constant 0 : i32
    %c0_i32_1 = arith.constant 0 : i32
    return %arg0, %c0_i32, %c0_i32_0 : i32, i32, i32
  }
  func.func @transform_16(%arg0: i32) -> (i32, i32, i32) {
    %c0_i32 = arith.constant 0 : i32
    %c0_i32_0 = arith.constant 0 : i32
    %c0_i32_1 = arith.constant 0 : i32
    return %arg0, %c0_i32, %c0_i32_0 : i32, i32, i32
  }
  func.func @transform_17(%arg0: i32) -> (i32, i32, i32) {
    %c0_i32 = arith.constant 0 : i32
    %c0_i32_0 = arith.constant 0 : i32
    %c0_i32_1 = arith.constant 0 : i32
    return %arg0, %c0_i32, %c0_i32_0 : i32, i32, i32
  }
  func.func @transform_18(%arg0: i32) -> (i32, i32) {
    %c0_i32 = arith.constant 0 : i32
    %c0_i32_0 = arith.constant 0 : i32
    %c0_i32_1 = arith.constant 0 : i32
    return %c0_i32, %c0_i32_0 : i32, i32
  }
  func.func @transform_19(%arg0: i32) -> (i32, i32) {
    %c0_i32 = arith.constant 0 : i32
    %c0_i32_0 = arith.constant 0 : i32
    %c0_i32_1 = arith.constant 0 : i32
    return %c0_i32, %c0_i32_0 : i32, i32
  }
  func.func @transform_20(%arg0: i32) -> (i32, i32) {
    %c0_i32 = arith.constant 0 : i32
    %c0_i32_0 = arith.constant 0 : i32
    %c0_i32_1 = arith.constant 0 : i32
    return %c0_i32, %c0_i32_0 : i32, i32
  }
  func.func @transform_21(%arg0: i32) -> (i32, i32) {
    %c0_i32 = arith.constant 0 : i32
    %c0_i32_0 = arith.constant 0 : i32
    %c0_i32_1 = arith.constant 0 : i32
    return %c0_i32, %c0_i32_0 : i32, i32
  }
  func.func @transform_22(%arg0: i32) -> (i32, i32) {
    %c0_i32 = arith.constant 0 : i32
    %c0_i32_0 = arith.constant 0 : i32
    %c0_i32_1 = arith.constant 0 : i32
    return %c0_i32, %c0_i32_0 : i32, i32
  }
  func.func @transform_23(%arg0: i32) -> (i32, i32) {
    %c0_i32 = arith.constant 0 : i32
    %c0_i32_0 = arith.constant 0 : i32
    %c0_i32_1 = arith.constant 0 : i32
    return %c0_i32, %c0_i32_0 : i32, i32
  }
  func.func @transform_24(%arg0: i32) -> (i32, i32) {
    %c0_i32 = arith.constant 0 : i32
    %c0_i32_0 = arith.constant 0 : i32
    %c0_i32_1 = arith.constant 0 : i32
    return %c0_i32, %c0_i32_0 : i32, i32
  }
  func.func @transform_25(%arg0: i32) -> (i32, i32) {
    %c0_i32 = arith.constant 0 : i32
    %c0_i32_0 = arith.constant 0 : i32
    %c0_i32_1 = arith.constant 0 : i32
    return %c0_i32, %c0_i32_0 : i32, i32
  }
}

</mosaic_0001>

<llo_original>
// kernel: squeeze.5
$region0: #{squeeze.5}
  %s0 = inlined_call_operand.vmem [shape: f32[16], index: 0, kind: input, shape index: {}]
  %s1 = inlined_call_operand.hbm [shape: f32[2,8], index: 1, kind: output, shape index: {}]
  $region1: #{squeeze.5} parent=0
    #allocation0 [shape = 'u8[1024]{0}', space=vmem, size = 0x400, scoped, tag = 'operand span for operand 1']
    #allocation1 [shape = 's32[1]{0}', space=sflag, size = 0x4, scoped, tag = 'scoped memory for squeeze.5']
    #allocation2 [shape = 'u8[4096]{0}', space=vmem, size = 0x1000, scoped, tag = 'scoped mem for output reshape']
    #allocation3 [shape = 'u8[4096]{0}', space=vmem, size = 0x1000, scoped, tag = 'scoped mem for input reshape']
    %2 = vsyncpa [#allocation1], 0
    %s4 = sshll.u32 1, 1
    %s5 = ssub.s32 %s4, 1
    %v6 = vld [vmem:[%s0] sm:%s5]
    %7 = vst [vmem:[#allocation3] sm:%s5] %v6
    %v8 = vld [vmem:[#allocation3] sm:$0x1]
    %vm9 = vcmask 64512
    %10 = vst.msk [vmem:[#allocation2] sm:$0x1] %vm9, %v8
    %v11 = vld [vmem:[#allocation3] sm:$0x1]
    %12 = vrot.lane.b32.xlu0 %v11, 120
    %v13 = vpop.permute.xlu0 %12
    %vm14 = vcmask 64512
    %s15 = scalar_lea.vmem [#allocation2], 1
    %16 = vst.msk [vmem:[%s15] sm:$0x1] %vm14, %v13
    %s18 = sshll.u32 1, 2
    %s19 = ssub.s32 %s18, 1
    %v21 = vld [vmem:[#allocation2] sm:%s19]
    %s22 = sshll.u32 1, 2
    %s23 = ssub.s32 %s22, 1
    %24 = vst [vmem:[#allocation0] sm:%s23] %v21
    %s26 = ssub.s32 32, 32
    %27 = vsyncadd [#allocation1], %s26
    %s29 = sshll.u32 [#allocation0], 4
    %s30 = int_to_ptr.vmem [resolvable:$true] %s29
    %32 = dma.vmem_to_hbm [thread:$0]  %s30, 32, %s1, [#allocation1]
    %33 = dma.done [#allocation1], 32
    %34 = vsyncpa [#allocation1], 1

// kernel: bert_qa_forward.1
$region0: #{bert_qa_forward.1}
  #allocation0 [shape = 'u32[]', space=smem, size = 0x4, offset = 0x4, fixed_abs, tag = 'smem constant byte address 0x4 - core index']
  #allocation1 [shape = 'u32[144,128]{1,0:T(1,128)}', space=vmem, size = 0x12000, scoped, tag = 'internal scratch']
  #allocation2 [shape = 'f32[16,32]{1,0:T(8,128)}', space=vmem, size = 0x2000, scoped, tag = 'scratch operand']
  %s0 = inlined_call_operand.vmem [shape: f32[16,32], index: 0, kind: input, shape index: {}]
  %s1 = inlined_call_operand.vmem [shape: f32[16,32], index: 1, kind: input, shape index: {}]
  %s2 = inlined_call_operand.vmem [shape: f32[16,32], index: 2, kind: input, shape index: {}]
  %s3 = inlined_call_operand.vmem [shape: f32[2,1,8], index: 3, kind: input, shape index: {}]
  %s4 = inlined_call_operand.vmem [shape: f32[1,32], index: 4, kind: input, shape index: {}]
  %s5 = inlined_call_operand.vmem [shape: f32[1,32], index: 5, kind: input, shape index: {}]
  %s6 = inlined_call_operand.vmem [shape: bf16[2,32,128], index: 6, kind: input, shape index: {}]
  %s7 = inlined_call_operand.vmem [shape: f32[2,1,128], index: 7, kind: input, shape index: {}]
  %s8 = inlined_call_operand.vmem [shape: bf16[2,32,32], index: 8, kind: input, shape index: {}]
  %s9 = inlined_call_operand.vmem [shape: f32[2,1,32], index: 9, kind: input, shape index: {}]
  %s10 = inlined_call_operand.vmem [shape: f32[2,1,32], index: 10, kind: input, shape index: {}]
  %s11 = inlined_call_operand.vmem [shape: f32[2,1,32], index: 11, kind: input, shape index: {}]
  %s12 = inlined_call_operand.vmem [shape: bf16[2,32,64], index: 12, kind: input, shape index: {}]
  %s13 = inlined_call_operand.vmem [shape: f32[2,1,64], index: 13, kind: input, shape index: {}]
  %s14 = inlined_call_operand.vmem [shape: bf16[2,64,32], index: 14, kind: input, shape index: {}]
  %s15 = inlined_call_operand.vmem [shape: f32[2,1,32], index: 15, kind: input, shape index: {}]
  %s16 = inlined_call_operand.vmem [shape: f32[2,1,32], index: 16, kind: input, shape index: {}]
  %s17 = inlined_call_operand.vmem [shape: f32[2,1,32], index: 17, kind: input, shape index: {}]
  %s18 = inlined_call_operand.vmem [shape: bf16[32,32], index: 18, kind: input, shape index: {}]
  %s19 = inlined_call_operand.vmem [shape: f32[1,32], index: 19, kind: input, shape index: {}]
  %s20 = inlined_call_operand.vmem [shape: bf16[32,128], index: 20, kind: input, shape index: {}]
  %s21 = inlined_call_operand.vmem [shape: f32[1,128], index: 21, kind: input, shape index: {}]
  %s22 = inlined_call_operand.vmem [shape: bf16[32,128], index: 22, kind: input, shape index: {}]
  %s23 = inlined_call_operand.vmem [shape: f32[1,128], index: 23, kind: input, shape index: {}]
  %s24 = inlined_call_operand.vmem [shape: f32[16,128], index: 24, kind: output, shape index: {0}]
  %s25 = inlined_call_operand.vmem [shape: f32[2,128], index: 25, kind: output, shape index: {1}]
  %26 = xla_tuple %s24, %s25
  %s27 = sld [smem:[#allocation0]]
  $region145: #{bert_qa_forward.1} parent=0
    _
  %s29 = ssub.s32 1, %s27
  %s30 = scalar_select 0, %s29, %s27
  loop: start=0, step=1, limit=4
  $region2: #{bert_qa_forward.1} parent=0 // loop_pre_header
    _
  $region3: #{bert_qa_forward.1} parent=0 // loop_header
    %s32 = sphi 0, %s36
    %p33 = scmp.ge.s32.totalorder %s32, 4
    %s40 = sphi 0, %s40
    %s42 = sphi 0, %s40
    %s43 = sphi 0, %s42
    %s57 = sphi 0, %s43
    %s61 = sphi 0, %s61
    %s63 = sphi 0, %s61
    %s64 = sphi 0, %s63
    %s78 = sphi 0, %s64
    %s82 = sphi 0, %s82
    %s84 = sphi 0, %s82
    %s85 = sphi 0, %s84
    %s99 = sphi 0, %s85
    %s103 = sphi 0, %s103
    %s105 = sphi 0, %s103
    %s106 = sphi 0, %s105
    %s120 = sphi 0, %s106
    %s124 = sphi 0, %s124
    %s126 = sphi 0, %s124
    %s127 = sphi 0, %s126
    %s141 = sphi 0, %s127
    %s145 = sphi 0, %s145
    %s147 = sphi 0, %s145
    %s148 = sphi 0, %s147
    %s162 = sphi 0, %s148
    %s168 = sphi 0, %s170
    %s171 = sphi 0, %s168
    %s172 = sphi 0, %s171
    %s188 = sphi 0, %s172
    %s194 = sphi 0, %s196
    %s197 = sphi 0, %s194
    %s198 = sphi 0, %s197
    %s214 = sphi 0, %s198
    %s220 = sphi 0, %s222
    %s223 = sphi 0, %s220
    %s224 = sphi 0, %s223
    %s240 = sphi 0, %s224
    %s246 = sphi 0, %s248
    %s249 = sphi 0, %s246
    %s250 = sphi 0, %s249
    %s266 = sphi 0, %s250
    %s272 = sphi 0, %s274
    %s275 = sphi 0, %s272
    %s276 = sphi 0, %s275
    %s292 = sphi 0, %s276
    %s298 = sphi 0, %s300
    %s301 = sphi 0, %s298
    %s302 = sphi 0, %s301
    %s318 = sphi 0, %s302
    %s324 = sphi 0, %s326
    %s327 = sphi 0, %s324
    %s328 = sphi 0, %s327
    %s344 = sphi 0, %s328
    %s350 = sphi 0, %s352
    %s353 = sphi 0, %s350
    %s354 = sphi 0, %s353
    %s370 = sphi 0, %s354
    %s376 = sphi 0, %s378
    %s379 = sphi 0, %s376
    %s380 = sphi 0, %s379
    %s396 = sphi 0, %s380
    %s402 = sphi 0, %s404
    %s405 = sphi 0, %s402
    %s406 = sphi 0, %s405
    %s422 = sphi 0, %s406
    %s428 = sphi 0, %s430
    %s431 = sphi 0, %s428
    %s432 = sphi 0, %s431
    %s448 = sphi 0, %s432
    %s454 = sphi 0, %s456
    %s457 = sphi 0, %s454
    %s458 = sphi 0, %s457
    %s474 = sphi 0, %s458
    %s478 = sphi 0, %s478
    %s480 = sphi 0, %s478
    %s481 = sphi 0, %s480
    %s495 = sphi 0, %s481
    %s499 = sphi 0, %s499
    %s501 = sphi 0, %s499
    %s502 = sphi 0, %s501
    %s516 = sphi 0, %s502
    %s520 = sphi 0, %s520
    %s522 = sphi 0, %s520
    %s523 = sphi 0, %s522
    %s537 = sphi 0, %s523
    %s541 = sphi 0, %s541
    %s543 = sphi 0, %s541
    %s544 = sphi 0, %s543
    %s558 = sphi 0, %s544
    %s562 = sphi 0, %s562
    %s564 = sphi 0, %s562
    %s565 = sphi 0, %s564
    %s579 = sphi 0, %s565
    %s583 = sphi 0, %s583
    %s585 = sphi 0, %s583
    %s586 = sphi 0, %s585
    %s600 = sphi 0, %s586
    %s604 = sphi 0, %s604
    %s606 = sphi 0, %s604
    %s607 = sphi 0, %s606
    %s621 = sphi 0, %s607
    %s625 = sphi 0, %s625
    %s627 = sphi 0, %s625
    %s628 = sphi 0, %s627
    %s642 = sphi 0, %s628
  $region4: #{bert_qa_forward.1} parent=0 // loop_header_branch
    %35 = sbr.rel (%p33) target = $region8
  $region5: #{bert_qa_forward.1} parent=0 // loop_body
    %s37 = ssub.s32 %s32, 1
    %s38 = ssub.s32 %s32, 2
    %s39 = sadd.s32 %s32, 1
    %s41 = sadd.s32 %s40, 1
    %p44 = scmp.eq.s32.totalorder %s32, 1
    %p45 = scmp.ne.s32.totalorder %s40, %s42
    %p46 = scmp.eq.s32.totalorder %s32, 0
    %p47 = por %p45, %p46
    %p48 = scmp.ne.s32.totalorder %s40, %s42
    %p49 = scmp.eq.s32.totalorder %s37, 1
    %p50 = por %p48, %p49
    %p51 = scmp.ne.s32.totalorder %s42, %s43
    %p52 = scmp.eq.s32.totalorder %s37, 0
    %p53 = por %p51, %p52
    %p54 = scmp.ne.s32.totalorder %s42, %s43
    %p55 = scmp.eq.s32.totalorder %s38, 1
    %p56 = por %p54, %p55
    %p58 = scmp.ne.s32.totalorder %s43, %s57
    %p59 = scmp.eq.s32.totalorder %s38, 0
    %p60 = por %p58, %p59
    %s62 = sadd.s32 %s61, 1
    %p65 = scmp.eq.s32.totalorder %s32, 1
    %p66 = scmp.ne.s32.totalorder %s61, %s63
    %p67 = scmp.eq.s32.totalorder %s32, 0
    %p68 = por %p66, %p67
    %p69 = scmp.ne.s32.totalorder %s61, %s63
    %p70 = scmp.eq.s32.totalorder %s37, 1
    %p71 = por %p69, %p70
    %p72 = scmp.ne.s32.totalorder %s63, %s64
    %p73 = scmp.eq.s32.totalorder %s37, 0
    %p74 = por %p72, %p73
    %p75 = scmp.ne.s32.totalorder %s63, %s64
    %p76 = scmp.eq.s32.totalorder %s38, 1
    %p77 = por %p75, %p76
    %p79 = scmp.ne.s32.totalorder %s64, %s78
    %p80 = scmp.eq.s32.totalorder %s38, 0
    %p81 = por %p79, %p80
    %s83 = sadd.s32 %s82, 1
    %p86 = scmp.eq.s32.totalorder %s32, 1
    %p87 = scmp.ne.s32.totalorder %s82, %s84
    %p88 = scmp.eq.s32.totalorder %s32, 0
    %p89 = por %p87, %p88
    %p90 = scmp.ne.s32.totalorder %s82, %s84
    %p91 = scmp.eq.s32.totalorder %s37, 1
    %p92 = por %p90, %p91
    %p93 = scmp.ne.s32.totalorder %s84, %s85
    %p94 = scmp.eq.s32.totalorder %s37, 0
    %p95 = por %p93, %p94
    %p96 = scmp.ne.s32.totalorder %s84, %s85
    %p97 = scmp.eq.s32.totalorder %s38, 1
    %p98 = por %p96, %p97
    %p100 = scmp.ne.s32.totalorder %s85, %s99
    %p101 = scmp.eq.s32.totalorder %s38, 0
    %p102 = por %p100, %p101
    %s104 = sadd.s32 %s103, 1
    %p107 = scmp.eq.s32.totalorder %s32, 1
    %p108 = scmp.ne.s32.totalorder %s103, %s105
    %p109 = scmp.eq.s32.totalorder %s32, 0
    %p110 = por %p108, %p109
    %p111 = scmp.ne.s32.totalorder %s103, %s105
    %p112 = scmp.eq.s32.totalorder %s37, 1
    %p113 = por %p111, %p112
    %p114 = scmp.ne.s32.totalorder %s105, %s106
    %p115 = scmp.eq.s32.totalorder %s37, 0
    %p116 = por %p114, %p115
    %p117 = scmp.ne.s32.totalorder %s105, %s106
    %p118 = scmp.eq.s32.totalorder %s38, 1
    %p119 = por %p117, %p118
    %p121 = scmp.ne.s32.totalorder %s106, %s120
    %p122 = scmp.eq.s32.totalorder %s38, 0
    %p123 = por %p121, %p122
    %s125 = sadd.s32 %s124, 1
    %p128 = scmp.eq.s32.totalorder %s32, 1
    %p129 = scmp.ne.s32.totalorder %s124, %s126
    %p130 = scmp.eq.s32.totalorder %s32, 0
    %p131 = por %p129, %p130
    %p132 = scmp.ne.s32.totalorder %s124, %s126
    %p133 = scmp.eq.s32.totalorder %s37, 1
    %p134 = por %p132, %p133
    %p135 = scmp.ne.s32.totalorder %s126, %s127
    %p136 = scmp.eq.s32.totalorder %s37, 0
    %p137 = por %p135, %p136
    %p138 = scmp.ne.s32.totalorder %s126, %s127
    %p139 = scmp.eq.s32.totalorder %s38, 1
    %p140 = por %p138, %p139
    %p142 = scmp.ne.s32.totalorder %s127, %s141
    %p143 = scmp.eq.s32.totalorder %s38, 0
    %p144 = por %p142, %p143
    %s146 = sadd.s32 %s145, 1
    %p149 = scmp.eq.s32.totalorder %s32, 1
    %p150 = scmp.ne.s32.totalorder %s145, %s147
    %p151 = scmp.eq.s32.totalorder %s32, 0
    %p152 = por %p150, %p151
    %p153 = scmp.ne.s32.totalorder %s145, %s147
    %p154 = scmp.eq.s32.totalorder %s37, 1
    %p155 = por %p153, %p154
    %p156 = scmp.ne.s32.totalorder %s147, %s148
    %p157 = scmp.eq.s32.totalorder %s37, 0
    %p158 = por %p156, %p157
    %p159 = scmp.ne.s32.totalorder %s147, %s148
    %p160 = scmp.eq.s32.totalorder %s38, 1
    %p161 = por %p159, %p160
    %p163 = scmp.ne.s32.totalorder %s148, %s162
    %p164 = scmp.eq.s32.totalorder %s38, 0
    %p165 = por %p163, %p164
    %s166 = ssub.s32 %s32, %s39
    %p167 = scmp.eq.s32.totalorder %s166, 0
    %s169 = sadd.s32 %s168, 1
    %s170 = scalar_select %p167, %s168, %s169
    %p173 = pneg %p167
    %p174 = scmp.eq.s32.totalorder %s32, 1
    %p175 = por %p173, %p174
    %p176 = scmp.ne.s32.totalorder %s168, %s171
    %p177 = scmp.eq.s32.totalorder %s32, 0
    %p178 = por %p176, %p177
    %p179 = scmp.ne.s32.totalorder %s168, %s171
    %p180 = scmp.eq.s32.totalorder %s37, 1
    %p181 = por %p179, %p180
    %p182 = scmp.ne.s32.totalorder %s171, %s172
    %p183 = scmp.eq.s32.totalorder %s37, 0
    %p184 = por %p182, %p183
    %p185 = scmp.ne.s32.totalorder %s171, %s172
    %p186 = scmp.eq.s32.totalorder %s38, 1
    %p187 = por %p185, %p186
    %p189 = scmp.ne.s32.totalorder %s172, %s188
    %p190 = scmp.eq.s32.totalorder %s38, 0
    %p191 = por %p189, %p190
    %s192 = ssub.s32 %s32, %s39
    %p193 = scmp.eq.s32.totalorder %s192, 0
    %s195 = sadd.s32 %s194, 1
    %s196 = scalar_select %p193, %s194, %s195
    %p199 = pneg %p193
    %p200 = scmp.eq.s32.totalorder %s32, 1
    %p201 = por %p199, %p200
    %p202 = scmp.ne.s32.totalorder %s194, %s197
    %p203 = scmp.eq.s32.totalorder %s32, 0
    %p204 = por %p202, %p203
    %p205 = scmp.ne.s32.totalorder %s194, %s197
    %p206 = scmp.eq.s32.totalorder %s37, 1
    %p207 = por %p205, %p206
    %p208 = scmp.ne.s32.totalorder %s197, %s198
    %p209 = scmp.eq.s32.totalorder %s37, 0
    %p210 = por %p208, %p209
    %p211 = scmp.ne.s32.totalorder %s197, %s198
    %p212 = scmp.eq.s32.totalorder %s38, 1
    %p213 = por %p211, %p212
    %p215 = scmp.ne.s32.totalorder %s198, %s214
    %p216 = scmp.eq.s32.totalorder %s38, 0
    %p217 = por %p215, %p216
    %s218 = ssub.s32 %s32, %s39
    %p219 = scmp.eq.s32.totalorder %s218, 0
    %s221 = sadd.s32 %s220, 1
    %s222 = scalar_select %p219, %s220, %s221
    %p225 = pneg %p219
    %p226 = scmp.eq.s32.totalorder %s32, 1
    %p227 = por %p225, %p226
    %p228 = scmp.ne.s32.totalorder %s220, %s223
    %p229 = scmp.eq.s32.totalorder %s32, 0
    %p230 = por %p228, %p229
    %p231 = scmp.ne.s32.totalorder %s220, %s223
    %p232 = scmp.eq.s32.totalorder %s37, 1
    %p233 = por %p231, %p232
    %p234 = scmp.ne.s32.totalorder %s223, %s224
    %p235 = scmp.eq.s32.totalorder %s37, 0
    %p236 = por %p234, %p235
    %p237 = scmp.ne.s32.totalorder %s223, %s224
    %p238 = scmp.eq.s32.totalorder %s38, 1
    %p239 = por %p237, %p238
    %p241 = scmp.ne.s32.totalorder %s224, %s240
    %p242 = scmp.eq.s32.totalorder %s38, 0
    %p243 = por %p241, %p242
    %s244 = ssub.s32 %s32, %s39
    %p245 = scmp.eq.s32.totalorder %s244, 0
    %s247 = sadd.s32 %s246, 1
    %s248 = scalar_select %p245, %s246, %s247
    %p251 = pneg %p245
    %p252 = scmp.eq.s32.totalorder %s32, 1
    %p253 = por %p251, %p252
    %p254 = scmp.ne.s32.totalorder %s246, %s249
    %p255 = scmp.eq.s32.totalorder %s32, 0
    %p256 = por %p254, %p255
    %p257 = scmp.ne.s32.totalorder %s246, %s249
    %p258 = scmp.eq.s32.totalorder %s37, 1
    %p259 = por %p257, %p258
    %p260 = scmp.ne.s32.totalorder %s249, %s250
    %p261 = scmp.eq.s32.totalorder %s37, 0
    %p262 = por %p260, %p261
    %p263 = scmp.ne.s32.totalorder %s249, %s250
    %p264 = scmp.eq.s32.totalorder %s38, 1
    %p265 = por %p263, %p264
    %p267 = scmp.ne.s32.totalorder %s250, %s266
    %p268 = scmp.eq.s32.totalorder %s38, 0
    %p269 = por %p267, %p268
    %s270 = ssub.s32 %s32, %s39
    %p271 = scmp.eq.s32.totalorder %s270, 0
    %s273 = sadd.s32 %s272, 1
    %s274 = scalar_select %p271, %s272, %s273
    %p277 = pneg %p271
    %p278 = scmp.eq.s32.totalorder %s32, 1
    %p279 = por %p277, %p278
    %p280 = scmp.ne.s32.totalorder %s272, %s275
    %p281 = scmp.eq.s32.totalorder %s32, 0
    %p282 = por %p280, %p281
    %p283 = scmp.ne.s32.totalorder %s272, %s275
    %p284 = scmp.eq.s32.totalorder %s37, 1
    %p285 = por %p283, %p284
    %p286 = scmp.ne.s32.totalorder %s275, %s276
    %p287 = scmp.eq.s32.totalorder %s37, 0
    %p288 = por %p286, %p287
    %p289 = scmp.ne.s32.totalorder %s275, %s276
    %p290 = scmp.eq.s32.totalorder %s38, 1
    %p291 = por %p289, %p290
    %p293 = scmp.ne.s32.totalorder %s276, %s292
    %p294 = scmp.eq.s32.totalorder %s38, 0
    %p295 = por %p293, %p294
    %s296 = ssub.s32 %s32, %s39
    %p297 = scmp.eq.s32.totalorder %s296, 0
    %s299 = sadd.s32 %s298, 1
    %s300 = scalar_select %p297, %s298, %s299
    %p303 = pneg %p297
    %p304 = scmp.eq.s32.totalorder %s32, 1
    %p305 = por %p303, %p304
    %p306 = scmp.ne.s32.totalorder %s298, %s301
    %p307 = scmp.eq.s32.totalorder %s32, 0
    %p308 = por %p306, %p307
    %p309 = scmp.ne.s32.totalorder %s298, %s301
    %p310 = scmp.eq.s32.totalorder %s37, 1
    %p311 = por %p309, %p310
    %p312 = scmp.ne.s32.totalorder %s301, %s302
    %p313 = scmp.eq.s32.totalorder %s37, 0
    %p314 = por %p312, %p313
    %p315 = scmp.ne.s32.totalorder %s301, %s302
    %p316 = scmp.eq.s32.totalorder %s38, 1
    %p317 = por %p315, %p316
    %p319 = scmp.ne.s32.totalorder %s302, %s318
    %p320 = scmp.eq.s32.totalorder %s38, 0
    %p321 = por %p319, %p320
    %s322 = ssub.s32 %s32, %s39
    %p323 = scmp.eq.s32.totalorder %s322, 0
    %s325 = sadd.s32 %s324, 1
    %s326 = scalar_select %p323, %s324, %s325
    %p329 = pneg %p323
    %p330 = scmp.eq.s32.totalorder %s32, 1
    %p331 = por %p329, %p330
    %p332 = scmp.ne.s32.totalorder %s324, %s327
    %p333 = scmp.eq.s32.totalorder %s32, 0
    %p334 = por %p332, %p333
    %p335 = scmp.ne.s32.totalorder %s324, %s327
    %p336 = scmp.eq.s32.totalorder %s37, 1
    %p337 = por %p335, %p336
    %p338 = scmp.ne.s32.totalorder %s327, %s328
    %p339 = scmp.eq.s32.totalorder %s37, 0
    %p340 = por %p338, %p339
    %p341 = scmp.ne.s32.totalorder %s327, %s328
    %p342 = scmp.eq.s32.totalorder %s38, 1
    %p343 = por %p341, %p342
    %p345 = scmp.ne.s32.totalorder %s328, %s344
    %p346 = scmp.eq.s32.totalorder %s38, 0
    %p347 = por %p345, %p346
    %s348 = ssub.s32 %s32, %s39
    %p349 = scmp.eq.s32.totalorder %s348, 0
    %s351 = sadd.s32 %s350, 1
    %s352 = scalar_select %p349, %s350, %s351
    %p355 = pneg %p349
    %p356 = scmp.eq.s32.totalorder %s32, 1
    %p357 = por %p355, %p356
    %p358 = scmp.ne.s32.totalorder %s350, %s353
    %p359 = scmp.eq.s32.totalorder %s32, 0
    %p360 = por %p358, %p359
    %p361 = scmp.ne.s32.totalorder %s350, %s353
    %p362 = scmp.eq.s32.totalorder %s37, 1
    %p363 = por %p361, %p362
    %p364 = scmp.ne.s32.totalorder %s353, %s354
    %p365 = scmp.eq.s32.totalorder %s37, 0
    %p366 = por %p364, %p365
    %p367 = scmp.ne.s32.totalorder %s353, %s354
    %p368 = scmp.eq.s32.totalorder %s38, 1
    %p369 = por %p367, %p368
    %p371 = scmp.ne.s32.totalorder %s354, %s370
    %p372 = scmp.eq.s32.totalorder %s38, 0
    %p373 = por %p371, %p372
    %s374 = ssub.s32 %s32, %s39
    %p375 = scmp.eq.s32.totalorder %s374, 0
    %s377 = sadd.s32 %s376, 1
    %s378 = scalar_select %p375, %s376, %s377
    %p381 = pneg %p375
    %p382 = scmp.eq.s32.totalorder %s32, 1
    %p383 = por %p381, %p382
    %p384 = scmp.ne.s32.totalorder %s376, %s379
    %p385 = scmp.eq.s32.totalorder %s32, 0
    %p386 = por %p384, %p385
    %p387 = scmp.ne.s32.totalorder %s376, %s379
    %p388 = scmp.eq.s32.totalorder %s37, 1
    %p389 = por %p387, %p388
    %p390 = scmp.ne.s32.totalorder %s379, %s380
    %p391 = scmp.eq.s32.totalorder %s37, 0
    %p392 = por %p390, %p391
    %p393 = scmp.ne.s32.totalorder %s379, %s380
    %p394 = scmp.eq.s32.totalorder %s38, 1
    %p395 = por %p393, %p394
    %p397 = scmp.ne.s32.totalorder %s380, %s396
    %p398 = scmp.eq.s32.totalorder %s38, 0
    %p399 = por %p397, %p398
    %s400 = ssub.s32 %s32, %s39
    %p401 = scmp.eq.s32.totalorder %s400, 0
    %s403 = sadd.s32 %s402, 1
    %s404 = scalar_select %p401, %s402, %s403
    %p407 = pneg %p401
    %p408 = scmp.eq.s32.totalorder %s32, 1
    %p409 = por %p407, %p408
    %p410 = scmp.ne.s32.totalorder %s402, %s405
    %p411 = scmp.eq.s32.totalorder %s32, 0
    %p412 = por %p410, %p411
    %p413 = scmp.ne.s32.totalorder %s402, %s405
    %p414 = scmp.eq.s32.totalorder %s37, 1
    %p415 = por %p413, %p414
    %p416 = scmp.ne.s32.totalorder %s405, %s406
    %p417 = scmp.eq.s32.totalorder %s37, 0
    %p418 = por %p416, %p417
    %p419 = scmp.ne.s32.totalorder %s405, %s406
    %p420 = scmp.eq.s32.totalorder %s38, 1
    %p421 = por %p419, %p420
    %p423 = scmp.ne.s32.totalorder %s406, %s422
    %p424 = scmp.eq.s32.totalorder %s38, 0
    %p425 = por %p423, %p424
    %s426 = ssub.s32 %s32, %s39
    %p427 = scmp.eq.s32.totalorder %s426, 0
    %s429 = sadd.s32 %s428, 1
    %s430 = scalar_select %p427, %s428, %s429
    %p433 = pneg %p427
    %p434 = scmp.eq.s32.totalorder %s32, 1
    %p435 = por %p433, %p434
    %p436 = scmp.ne.s32.totalorder %s428, %s431
    %p437 = scmp.eq.s32.totalorder %s32, 0
    %p438 = por %p436, %p437
    %p439 = scmp.ne.s32.totalorder %s428, %s431
    %p440 = scmp.eq.s32.totalorder %s37, 1
    %p441 = por %p439, %p440
    %p442 = scmp.ne.s32.totalorder %s431, %s432
    %p443 = scmp.eq.s32.totalorder %s37, 0
    %p444 = por %p442, %p443
    %p445 = scmp.ne.s32.totalorder %s431, %s432
    %p446 = scmp.eq.s32.totalorder %s38, 1
    %p447 = por %p445, %p446
    %p449 = scmp.ne.s32.totalorder %s432, %s448
    %p450 = scmp.eq.s32.totalorder %s38, 0
    %p451 = por %p449, %p450
    %s452 = ssub.s32 %s32, %s39
    %p453 = scmp.eq.s32.totalorder %s452, 0
    %s455 = sadd.s32 %s454, 1
    %s456 = scalar_select %p453, %s454, %s455
    %p459 = pneg %p453
    %p460 = scmp.eq.s32.totalorder %s32, 1
    %p461 = por %p459, %p460
    %p462 = scmp.ne.s32.totalorder %s454, %s457
    %p463 = scmp.eq.s32.totalorder %s32, 0
    %p464 = por %p462, %p463
    %p465 = scmp.ne.s32.totalorder %s454, %s457
    %p466 = scmp.eq.s32.totalorder %s37, 1
    %p467 = por %p465, %p466
    %p468 = scmp.ne.s32.totalorder %s457, %s458
    %p469 = scmp.eq.s32.totalorder %s37, 0
    %p470 = por %p468, %p469
    %p471 = scmp.ne.s32.totalorder %s457, %s458
    %p472 = scmp.eq.s32.totalorder %s38, 1
    %p473 = por %p471, %p472
    %p475 = scmp.ne.s32.totalorder %s458, %s474
    %p476 = scmp.eq.s32.totalorder %s38, 0
    %p477 = por %p475, %p476
    %s479 = sadd.s32 %s478, 1
    %p482 = scmp.eq.s32.totalorder %s32, 1
    %p483 = scmp.ne.s32.totalorder %s478, %s480
    %p484 = scmp.eq.s32.totalorder %s32, 0
    %p485 = por %p483, %p484
    %p486 = scmp.ne.s32.totalorder %s478, %s480
    %p487 = scmp.eq.s32.totalorder %s37, 1
    %p488 = por %p486, %p487
    %p489 = scmp.ne.s32.totalorder %s480, %s481
    %p490 = scmp.eq.s32.totalorder %s37, 0
    %p491 = por %p489, %p490
    %p492 = scmp.ne.s32.totalorder %s480, %s481
    %p493 = scmp.eq.s32.totalorder %s38, 1
    %p494 = por %p492, %p493
    %p496 = scmp.ne.s32.totalorder %s481, %s495
    %p497 = scmp.eq.s32.totalorder %s38, 0
    %p498 = por %p496, %p497
    %s500 = sadd.s32 %s499, 1
    %p503 = scmp.eq.s32.totalorder %s32, 1
    %p504 = scmp.ne.s32.totalorder %s499, %s501
    %p505 = scmp.eq.s32.totalorder %s32, 0
    %p506 = por %p504, %p505
    %p507 = scmp.ne.s32.totalorder %s499, %s501
    %p508 = scmp.eq.s32.totalorder %s37, 1
    %p509 = por %p507, %p508
    %p510 = scmp.ne.s32.totalorder %s501, %s502
    %p511 = scmp.eq.s32.totalorder %s37, 0
    %p512 = por %p510, %p511
    %p513 = scmp.ne.s32.totalorder %s501, %s502
    %p514 = scmp.eq.s32.totalorder %s38, 1
    %p515 = por %p513, %p514
    %p517 = scmp.ne.s32.totalorder %s502, %s516
    %p518 = scmp.eq.s32.totalorder %s38, 0
    %p519 = por %p517, %p518
    %s521 = sadd.s32 %s520, 1
    %p524 = scmp.eq.s32.totalorder %s32, 1
    %p525 = scmp.ne.s32.totalorder %s520, %s522
    %p526 = scmp.eq.s32.totalorder %s32, 0
    %p527 = por %p525, %p526
    %p528 = scmp.ne.s32.totalorder %s520, %s522
    %p529 = scmp.eq.s32.totalorder %s37, 1
    %p530 = por %p528, %p529
    %p531 = scmp.ne.s32.totalorder %s522, %s523
    %p532 = scmp.eq.s32.totalorder %s37, 0
    %p533 = por %p531, %p532
    %p534 = scmp.ne.s32.totalorder %s522, %s523
    %p535 = scmp.eq.s32.totalorder %s38, 1
    %p536 = por %p534, %p535
    %p538 = scmp.ne.s32.totalorder %s523, %s537
    %p539 = scmp.eq.s32.totalorder %s38, 0
    %p540 = por %p538, %p539
    %s542 = sadd.s32 %s541, 1
    %p545 = scmp.eq.s32.totalorder %s32, 1
    %p546 = scmp.ne.s32.totalorder %s541, %s543
    %p547 = scmp.eq.s32.totalorder %s32, 0
    %p548 = por %p546, %p547
    %p549 = scmp.ne.s32.totalorder %s541, %s543
    %p550 = scmp.eq.s32.totalorder %s37, 1
    %p551 = por %p549, %p550
    %p552 = scmp.ne.s32.totalorder %s543, %s544
    %p553 = scmp.eq.s32.totalorder %s37, 0
    %p554 = por %p552, %p553
    %p555 = scmp.ne.s32.totalorder %s543, %s544
    %p556 = scmp.eq.s32.totalorder %s38, 1
    %p557 = por %p555, %p556
    %p559 = scmp.ne.s32.totalorder %s544, %s558
    %p560 = scmp.eq.s32.totalorder %s38, 0
    %p561 = por %p559, %p560
    %s563 = sadd.s32 %s562, 1
    %p566 = scmp.eq.s32.totalorder %s32, 1
    %p567 = scmp.ne.s32.totalorder %s562, %s564
    %p568 = scmp.eq.s32.totalorder %s32, 0
    %p569 = por %p567, %p568
    %p570 = scmp.ne.s32.totalorder %s562, %s564
    %p571 = scmp.eq.s32.totalorder %s37, 1
    %p572 = por %p570, %p571
    %p573 = scmp.ne.s32.totalorder %s564, %s565
    %p574 = scmp.eq.s32.totalorder %s37, 0
    %p575 = por %p573, %p574
    %p576 = scmp.ne.s32.totalorder %s564, %s565
    %p577 = scmp.eq.s32.totalorder %s38, 1
    %p578 = por %p576, %p577
    %p580 = scmp.ne.s32.totalorder %s565, %s579
    %p581 = scmp.eq.s32.totalorder %s38, 0
    %p582 = por %p580, %p581
    %s584 = sadd.s32 %s583, 1
    %p587 = scmp.eq.s32.totalorder %s32, 1
    %p588 = scmp.ne.s32.totalorder %s583, %s585
    %p589 = scmp.eq.s32.totalorder %s32, 0
    %p590 = por %p588, %p589
    %p591 = scmp.ne.s32.totalorder %s583, %s585
    %p592 = scmp.eq.s32.totalorder %s37, 1
    %p593 = por %p591, %p592
    %p594 = scmp.ne.s32.totalorder %s585, %s586
    %p595 = scmp.eq.s32.totalorder %s37, 0
    %p596 = por %p594, %p595
    %p597 = scmp.ne.s32.totalorder %s585, %s586
    %p598 = scmp.eq.s32.totalorder %s38, 1
    %p599 = por %p597, %p598
    %p601 = scmp.ne.s32.totalorder %s586, %s600
    %p602 = scmp.eq.s32.totalorder %s38, 0
    %p603 = por %p601, %p602
    %s605 = sadd.s32 %s604, 1
    %p608 = scmp.eq.s32.totalorder %s32, 1
    %p609 = scmp.ne.s32.totalorder %s604, %s606
    %p610 = scmp.eq.s32.totalorder %s32, 0
    %p611 = por %p609, %p610
    %p612 = scmp.ne.s32.totalorder %s604, %s606
    %p613 = scmp.eq.s32.totalorder %s37, 1
    %p614 = por %p612, %p613
    %p615 = scmp.ne.s32.totalorder %s606, %s607
    %p616 = scmp.eq.s32.totalorder %s37, 0
    %p617 = por %p615, %p616
    %p618 = scmp.ne.s32.totalorder %s606, %s607
    %p619 = scmp.eq.s32.totalorder %s38, 1
    %p620 = por %p618, %p619
    %p622 = scmp.ne.s32.totalorder %s607, %s621
    %p623 = scmp.eq.s32.totalorder %s38, 0
    %p624 = por %p622, %p623
    %s626 = sadd.s32 %s625, 1
    %p629 = scmp.eq.s32.totalorder %s32, 1
    %p630 = scmp.ne.s32.totalorder %s625, %s627
    %p631 = scmp.eq.s32.totalorder %s32, 0
    %p632 = por %p630, %p631
    %p633 = scmp.ne.s32.totalorder %s625, %s627
    %p634 = scmp.eq.s32.totalorder %s37, 1
    %p635 = por %p633, %p634
    %p636 = scmp.ne.s32.totalorder %s627, %s628
    %p637 = scmp.eq.s32.totalorder %s37, 0
    %p638 = por %p636, %p637
    %p639 = scmp.ne.s32.totalorder %s627, %s628
    %p640 = scmp.eq.s32.totalorder %s38, 1
    %p641 = por %p639, %p640
    %p643 = scmp.ne.s32.totalorder %s628, %s642
    %p644 = scmp.eq.s32.totalorder %s38, 0
    %p645 = por %p643, %p644
    %p646 = scmp.le.s32.totalorder 1, %s32
    %p647 = scmp.lt.s32.totalorder %s32, 3
    %p648 = pnand %p646, %p647
    %p649 = pneg %p648
    // Predicated region
    $region9: #{bert_qa_forward.1} parent=5 // pred_check
      _
    $region10: #{bert_qa_forward.1} parent=5 // pred_check_branch
      %651 = sbr.rel (%p648) target = $region12
    $region11: #{bert_qa_forward.1} parent=5 // pred_region
      %s652 = ssub.s32 %s32, 1
      // Predicated region
      $region13: #{bert_qa_forward.1} parent=11 // pred_check
        %p653 = pneg %p53
      $region14: #{bert_qa_forward.1} parent=11 // pred_check_branch
        %655 = sbr.rel (%p653) target = $region16
      $region15: #{bert_qa_forward.1} parent=11 // pred_region
        _
      $region16: #{bert_qa_forward.1} parent=11 // pred_fallthru
        _
      // Predicated region
      $region17: #{bert_qa_forward.1} parent=11 // pred_check
        %p656 = pneg %p74
      $region18: #{bert_qa_forward.1} parent=11 // pred_check_branch
        %658 = sbr.rel (%p656) target = $region20
      $region19: #{bert_qa_forward.1} parent=11 // pred_region
        _
      $region20: #{bert_qa_forward.1} parent=11 // pred_fallthru
        _
      // Predicated region
      $region21: #{bert_qa_forward.1} parent=11 // pred_check
        %p659 = pneg %p95
      $region22: #{bert_qa_forward.1} parent=11 // pred_check_branch
        %661 = sbr.rel (%p659) target = $region24
      $region23: #{bert_qa_forward.1} parent=11 // pred_region
        _
      $region24: #{bert_qa_forward.1} parent=11 // pred_fallthru
        _
      // Predicated region
      $region25: #{bert_qa_forward.1} parent=11 // pred_check
        %p662 = pneg %p116
      $region26: #{bert_qa_forward.1} parent=11 // pred_check_branch
        %664 = sbr.rel (%p662) target = $region28
      $region27: #{bert_qa_forward.1} parent=11 // pred_region
        _
      $region28: #{bert_qa_forward.1} parent=11 // pred_fallthru
        _
      // Predicated region
      $region29: #{bert_qa_forward.1} parent=11 // pred_check
        %p665 = pneg %p137
      $region30: #{bert_qa_forward.1} parent=11 // pred_check_branch
        %667 = sbr.rel (%p665) target = $region32
      $region31: #{bert_qa_forward.1} parent=11 // pred_region
        _
      $region32: #{bert_qa_forward.1} parent=11 // pred_fallthru
        _
      // Predicated region
      $region33: #{bert_qa_forward.1} parent=11 // pred_check
        %p668 = pneg %p158
      $region34: #{bert_qa_forward.1} parent=11 // pred_check_branch
        %670 = sbr.rel (%p668) target = $region36
      $region35: #{bert_qa_forward.1} parent=11 // pred_region
        _
      $region36: #{bert_qa_forward.1} parent=11 // pred_fallthru
        _
      // Predicated region
      $region37: #{bert_qa_forward.1} parent=11 // pred_check
        %p671 = pneg %p491
      $region38: #{bert_qa_forward.1} parent=11 // pred_check_branch
        %673 = sbr.rel (%p671) target = $region40
      $region39: #{bert_qa_forward.1} parent=11 // pred_region
        _
      $region40: #{bert_qa_forward.1} parent=11 // pred_fallthru
        _
      // Predicated region
      $region41: #{bert_qa_forward.1} parent=11 // pred_check
        %p674 = pneg %p512
      $region42: #{bert_qa_forward.1} parent=11 // pred_check_branch
        %676 = sbr.rel (%p674) target = $region44
      $region43: #{bert_qa_forward.1} parent=11 // pred_region
        _
      $region44: #{bert_qa_forward.1} parent=11 // pred_fallthru
        _
      // Predicated region
      $region45: #{bert_qa_forward.1} parent=11 // pred_check
        %p677 = pneg %p533
      $region46: #{bert_qa_forward.1} parent=11 // pred_check_branch
        %679 = sbr.rel (%p677) target = $region48
      $region47: #{bert_qa_forward.1} parent=11 // pred_region
        _
      $region48: #{bert_qa_forward.1} parent=11 // pred_fallthru
        _
      // Predicated region
      $region49: #{bert_qa_forward.1} parent=11 // pred_check
        %p680 = pneg %p554
      $region50: #{bert_qa_forward.1} parent=11 // pred_check_branch
        %682 = sbr.rel (%p680) target = $region52
      $region51: #{bert_qa_forward.1} parent=11 // pred_region
        _
      $region52: #{bert_qa_forward.1} parent=11 // pred_fallthru
        _
      // Predicated region
      $region53: #{bert_qa_forward.1} parent=11 // pred_check
        %p683 = pneg %p575
      $region54: #{bert_qa_forward.1} parent=11 // pred_check_branch
        %685 = sbr.rel (%p683) target = $region56
      $region55: #{bert_qa_forward.1} parent=11 // pred_region
        _
      $region56: #{bert_qa_forward.1} parent=11 // pred_fallthru
        _
      // Predicated region
      $region57: #{bert_qa_forward.1} parent=11 // pred_check
        %p686 = pneg %p596
      $region58: #{bert_qa_forward.1} parent=11 // pred_check_branch
        %688 = sbr.rel (%p686) target = $region60
      $region59: #{bert_qa_forward.1} parent=11 // pred_region
        _
      $region60: #{bert_qa_forward.1} parent=11 // pred_fallthru
        _
    $region12: #{bert_qa_forward.1} parent=5 // pred_fallthru
      _
    %p689 = scmp.lt.s32.totalorder %s32, 2
    // Predicated region
    $region61: #{bert_qa_forward.1} parent=5 // pred_check
      %p690 = pneg %p689
    $region62: #{bert_qa_forward.1} parent=5 // pred_check_branch
      %692 = sbr.rel (%p690) target = $region64
    $region63: #{bert_qa_forward.1} parent=5 // pred_region
      // Predicated region
      $region65: #{bert_qa_forward.1} parent=63 // pred_check
        %p693 = pneg %p178
      $region66: #{bert_qa_forward.1} parent=63 // pred_check_branch
        %695 = sbr.rel (%p693) target = $region68
      $region67: #{bert_qa_forward.1} parent=63 // pred_region
        %p696 = scmp.lt.s32.totalorder %s32, 1
        %s697 = scalar_select %p696, %s32, 1
        %s698 = smul.addr %s697, 4
        %s699 = smul.addr %s698, 4
        %s700 = scalar_lea.vmem %s6, %s699
      $region68: #{bert_qa_forward.1} parent=63 // pred_fallthru
        _
      // Predicated region
      $region69: #{bert_qa_forward.1} parent=63 // pred_check
        %p701 = pneg %p204
      $region70: #{bert_qa_forward.1} parent=63 // pred_check_branch
        %703 = sbr.rel (%p701) target = $region72
      $region71: #{bert_qa_forward.1} parent=63 // pred_region
        %p704 = scmp.lt.s32.totalorder %s32, 1
        %s705 = scalar_select %p704, %s32, 1
        %s706 = scalar_lea.vmem %s7, %s705
      $region72: #{bert_qa_forward.1} parent=63 // pred_fallthru
        _
      // Predicated region
      $region73: #{bert_qa_forward.1} parent=63 // pred_check
        %p707 = pneg %p230
      $region74: #{bert_qa_forward.1} parent=63 // pred_check_branch
        %709 = sbr.rel (%p707) target = $region76
      $region75: #{bert_qa_forward.1} parent=63 // pred_region
        %p710 = scmp.lt.s32.totalorder %s32, 1
        %s711 = scalar_select %p710, %s32, 1
        %s712 = smul.addr %s711, 4
        %s713 = smul.addr %s712, 4
        %s714 = scalar_lea.vmem %s8, %s713
      $region76: #{bert_qa_forward.1} parent=63 // pred_fallthru
        _
      // Predicated region
      $region77: #{bert_qa_forward.1} parent=63 // pred_check
        %p715 = pneg %p256
      $region78: #{bert_qa_forward.1} parent=63 // pred_check_branch
        %717 = sbr.rel (%p715) target = $region80
      $region79: #{bert_qa_forward.1} parent=63 // pred_region
        %p718 = scmp.lt.s32.totalorder %s32, 1
        %s719 = scalar_select %p718, %s32, 1
        %s720 = scalar_lea.vmem %s9, %s719
      $region80: #{bert_qa_forward.1} parent=63 // pred_fallthru
        _
      // Predicated region
      $region81: #{bert_qa_forward.1} parent=63 // pred_check
        %p721 = pneg %p282
      $region82: #{bert_qa_forward.1} parent=63 // pred_check_branch
        %723 = sbr.rel (%p721) target = $region84
      $region83: #{bert_qa_forward.1} parent=63 // pred_region
        %p724 = scmp.lt.s32.totalorder %s32, 1
        %s725 = scalar_select %p724, %s32, 1
        %s726 = scalar_lea.vmem %s10, %s725
      $region84: #{bert_qa_forward.1} parent=63 // pred_fallthru
        _
      // Predicated region
      $region85: #{bert_qa_forward.1} parent=63 // pred_check
        %p727 = pneg %p308
      $region86: #{bert_qa_forward.1} parent=63 // pred_check_branch
        %729 = sbr.rel (%p727) target = $region88
      $region87: #{bert_qa_forward.1} parent=63 // pred_region
        %p730 = scmp.lt.s32.totalorder %s32, 1
        %s731 = scalar_select %p730, %s32, 1
        %s732 = scalar_lea.vmem %s11, %s731
      $region88: #{bert_qa_forward.1} parent=63 // pred_fallthru
        _
      // Predicated region
      $region89: #{bert_qa_forward.1} parent=63 // pred_check
        %p733 = pneg %p334
      $region90: #{bert_qa_forward.1} parent=63 // pred_check_branch
        %735 = sbr.rel (%p733) target = $region92
      $region91: #{bert_qa_forward.1} parent=63 // pred_region
        %p736 = scmp.lt.s32.totalorder %s32, 1
        %s737 = scalar_select %p736, %s32, 1
        %s738 = smul.addr %s737, 4
        %s739 = smul.addr %s738, 4
        %s740 = scalar_lea.vmem %s12, %s739
      $region92: #{bert_qa_forward.1} parent=63 // pred_fallthru
        _
      // Predicated region
      $region93: #{bert_qa_forward.1} parent=63 // pred_check
        %p741 = pneg %p360
      $region94: #{bert_qa_forward.1} parent=63 // pred_check_branch
        %743 = sbr.rel (%p741) target = $region96
      $region95: #{bert_qa_forward.1} parent=63 // pred_region
        %p744 = scmp.lt.s32.totalorder %s32, 1
        %s745 = scalar_select %p744, %s32, 1
        %s746 = scalar_lea.vmem %s13, %s745
      $region96: #{bert_qa_forward.1} parent=63 // pred_fallthru
        _
      // Predicated region
      $region97: #{bert_qa_forward.1} parent=63 // pred_check
        %p747 = pneg %p386
      $region98: #{bert_qa_forward.1} parent=63 // pred_check_branch
        %749 = sbr.rel (%p747) target = $region100
      $region99: #{bert_qa_forward.1} parent=63 // pred_region
        %p750 = scmp.lt.s32.totalorder %s32, 1
        %s751 = scalar_select %p750, %s32, 1
        %s752 = smul.addr %s751, 8
        %s753 = smul.addr %s752, 4
        %s754 = scalar_lea.vmem %s14, %s753
      $region100: #{bert_qa_forward.1} parent=63 // pred_fallthru
        _
      // Predicated region
      $region101: #{bert_qa_forward.1} parent=63 // pred_check
        %p755 = pneg %p412
      $region102: #{bert_qa_forward.1} parent=63 // pred_check_branch
        %757 = sbr.rel (%p755) target = $region104
      $region103: #{bert_qa_forward.1} parent=63 // pred_region
        %p758 = scmp.lt.s32.totalorder %s32, 1
        %s759 = scalar_select %p758, %s32, 1
        %s760 = scalar_lea.vmem %s15, %s759
      $region104: #{bert_qa_forward.1} parent=63 // pred_fallthru
        _
      // Predicated region
      $region105: #{bert_qa_forward.1} parent=63 // pred_check
        %p761 = pneg %p438
      $region106: #{bert_qa_forward.1} parent=63 // pred_check_branch
        %763 = sbr.rel (%p761) target = $region108
      $region107: #{bert_qa_forward.1} parent=63 // pred_region
        %p764 = scmp.lt.s32.totalorder %s32, 1
        %s765 = scalar_select %p764, %s32, 1
        %s766 = scalar_lea.vmem %s16, %s765
      $region108: #{bert_qa_forward.1} parent=63 // pred_fallthru
        _
      // Predicated region
      $region109: #{bert_qa_forward.1} parent=63 // pred_check
        %p767 = pneg %p464
      $region110: #{bert_qa_forward.1} parent=63 // pred_check_branch
        %769 = sbr.rel (%p767) target = $region112
      $region111: #{bert_qa_forward.1} parent=63 // pred_region
        %p770 = scmp.lt.s32.totalorder %s32, 1
        %s771 = scalar_select %p770, %s32, 1
        %s772 = scalar_lea.vmem %s17, %s771
      $region112: #{bert_qa_forward.1} parent=63 // pred_fallthru
        _
    $region64: #{bert_qa_forward.1} parent=5 // pred_fallthru
      _
    %p773 = scmp.le.s32.totalorder 1, %s32
    %p774 = scmp.lt.s32.totalorder %s32, 3
    %p775 = pnand %p773, %p774
    %p776 = pneg %p775
    // Predicated region
    $region113: #{bert_qa_forward.1} parent=5 // pred_check
      _
    $region114: #{bert_qa_forward.1} parent=5 // pred_check_branch
      %778 = sbr.rel (%p775) target = $region116
    $region115: #{bert_qa_forward.1} parent=5 // pred_region
      %s779 = ssub.s32 %s32, 1
      %p780 = pneg %p53
      %p781 = pneg %p50
      %p782 = pneg %p74
      %p783 = pneg %p71
      %p784 = pneg %p95
      %p785 = pneg %p92
      %p786 = pneg %p116
      %p787 = pneg %p113
      %p788 = pneg %p137
      %p789 = pneg %p134
      %p790 = pneg %p158
      %p791 = pneg %p155
      %p792 = scmp.lt.s32.totalorder %s37, 1
      %s793 = scalar_select %p792, %s37, 1
      %s794 = smul.addr %s793, 4
      %s795 = smul.addr %s794, 4
      %s796 = scalar_lea.vmem %s6, %s795
      %p797 = pneg %p184
      %p798 = pneg %p181
      %p799 = scmp.lt.s32.totalorder %s37, 1
      %s800 = scalar_select %p799, %s37, 1
      %s801 = scalar_lea.vmem %s7, %s800
      %p802 = pneg %p210
      %p803 = pneg %p207
      %p804 = scmp.lt.s32.totalorder %s37, 1
      %s805 = scalar_select %p804, %s37, 1
      %s806 = smul.addr %s805, 4
      %s807 = smul.addr %s806, 4
      %s808 = scalar_lea.vmem %s8, %s807
      %p809 = pneg %p236
      %p810 = pneg %p233
      %p811 = scmp.lt.s32.totalorder %s37, 1
      %s812 = scalar_select %p811, %s37, 1
      %s813 = scalar_lea.vmem %s9, %s812
      %p814 = pneg %p262
      %p815 = pneg %p259
      %p816 = scmp.lt.s32.totalorder %s37, 1
      %s817 = scalar_select %p816, %s37, 1
      %s818 = scalar_lea.vmem %s10, %s817
      %p819 = pneg %p288
      %p820 = pneg %p285
      %p821 = scmp.lt.s32.totalorder %s37, 1
      %s822 = scalar_select %p821, %s37, 1
      %s823 = scalar_lea.vmem %s11, %s822
      %p824 = pneg %p314
      %p825 = pneg %p311
      %p826 = scmp.lt.s32.totalorder %s37, 1
      %s827 = scalar_select %p826, %s37, 1
      %s828 = smul.addr %s827, 4
      %s829 = smul.addr %s828, 4
      %s830 = scalar_lea.vmem %s12, %s829
      %p831 = pneg %p340
      %p832 = pneg %p337
      %p833 = scmp.lt.s32.totalorder %s37, 1
      %s834 = scalar_select %p833, %s37, 1
      %s835 = scalar_lea.vmem %s13, %s834
      %p836 = pneg %p366
      %p837 = pneg %p363
      %p838 = scmp.lt.s32.totalorder %s37, 1
      %s839 = scalar_select %p838, %s37, 1
      %s840 = smul.addr %s839, 8
      %s841 = smul.addr %s840, 4
      %s842 = scalar_lea.vmem %s14, %s841
      %p843 = pneg %p392
      %p844 = pneg %p389
      %p845 = scmp.lt.s32.totalorder %s37, 1
      %s846 = scalar_select %p845, %s37, 1
      %s847 = scalar_lea.vmem %s15, %s846
      %p848 = pneg %p418
      %p849 = pneg %p415
      %p850 = scmp.lt.s32.totalorder %s37, 1
      %s851 = scalar_select %p850, %s37, 1
      %s852 = scalar_lea.vmem %s16, %s851
      %p853 = pneg %p444
      %p854 = pneg %p441
      %p855 = scmp.lt.s32.totalorder %s37, 1
      %s856 = scalar_select %p855, %s37, 1
      %s857 = scalar_lea.vmem %s17, %s856
      %p858 = pneg %p470
      %p859 = pneg %p467
      %p860 = pneg %p491
      %p861 = pneg %p488
      %p862 = pneg %p512
      %p863 = pneg %p509
      %p864 = pneg %p533
      %p865 = pneg %p530
      %p866 = pneg %p554
      %p867 = pneg %p551
      %p868 = pneg %p575
      %p869 = pneg %p572
      %p870 = pneg %p596
      %p871 = pneg %p593
      %p872 = pneg %p617
      %p873 = pneg %p614
      %p874 = pneg %p638
      %p875 = pneg %p635
      %p876 = scmp.lt.s32.totalorder %s37, 1
      %s877 = scalar_select %p876, %s37, 1
      %s878 = smul.addr %s877, 4
      %s879 = smul.addr %s878, 4
      %s880 = scalar_lea.vmem %s6, %s879
      %p881 = scmp.lt.s32.totalorder %s37, 1
      %s882 = scalar_select %p881, %s37, 1
      %s883 = scalar_lea.vmem %s7, %s882
      %p884 = scmp.lt.s32.totalorder %s37, 1
      %s885 = scalar_select %p884, %s37, 1
      %s886 = smul.addr %s885, 4
      %s887 = smul.addr %s886, 4
      %s888 = scalar_lea.vmem %s8, %s887
      %p889 = scmp.lt.s32.totalorder %s37, 1
      %s890 = scalar_select %p889, %s37, 1
      %s891 = scalar_lea.vmem %s9, %s890
      %p892 = scmp.lt.s32.totalorder %s37, 1
      %s893 = scalar_select %p892, %s37, 1
      %s894 = scalar_lea.vmem %s10, %s893
      %p895 = scmp.lt.s32.totalorder %s37, 1
      %s896 = scalar_select %p895, %s37, 1
      %s897 = scalar_lea.vmem %s11, %s896
      %p898 = scmp.lt.s32.totalorder %s37, 1
      %s899 = scalar_select %p898, %s37, 1
      %s900 = smul.addr %s899, 4
      %s901 = smul.addr %s900, 4
      %s902 = scalar_lea.vmem %s12, %s901
      %p903 = scmp.lt.s32.totalorder %s37, 1
      %s904 = scalar_select %p903, %s37, 1
      %s905 = scalar_lea.vmem %s13, %s904
      %p906 = scmp.lt.s32.totalorder %s37, 1
      %s907 = scalar_select %p906, %s37, 1
      %s908 = smul.addr %s907, 8
      %s909 = smul.addr %s908, 4
      %s910 = scalar_lea.vmem %s14, %s909
      %p911 = scmp.lt.s32.totalorder %s37, 1
      %s912 = scalar_select %p911, %s37, 1
      %s913 = scalar_lea.vmem %s15, %s912
      %p914 = scmp.lt.s32.totalorder %s37, 1
      %s915 = scalar_select %p914, %s37, 1
      %s916 = scalar_lea.vmem %s16, %s915
      %p917 = scmp.lt.s32.totalorder %s37, 1
      %s918 = scalar_select %p917, %s37, 1
      %s919 = scalar_lea.vmem %s17, %s918
      %p921 = scmp.eq.s32.totalorder %s37, 0
      // Predicated region
      $region117: #{bert_qa_forward.1} parent=115 // pred_check
        %p922 = pneg %p921
      $region118: #{bert_qa_forward.1} parent=115 // pred_check_branch
        %924 = sbr.rel (%p922) target = $region120
      $region119: #{bert_qa_forward.1} parent=115 // pred_region
        %v925 = vld [vmem:[%s0] sm:$0xff]
        %v926 = vld [vmem:[%s0 + $0x8] sm:$0xff]
        %v927 = vld [vmem:[%s1] sm:$0xff]
        %v928 = vld [vmem:[%s1 + $0x8] sm:$0xff]
        %v929 = vadd.f32 %v925, %v927
        %v930 = vadd.f32 %v926, %v928
        %v931 = vld [vmem:[%s2] sm:$0xff]
        %v932 = vld [vmem:[%s2 + $0x8] sm:$0xff]
        %v933 = vadd.f32 %v929, %v931
        %v934 = vadd.f32 %v930, %v932
        %v935 = vld [vmem:[%s4] sm:$0x1]
        %v936 = vld [vmem:[%s5] sm:$0x1]
        %vm937 = vcmask 261120
        %v938 = vsel %vm937, %v933, 0.0
        %939 = vadd.xlane.f32.xlu0 %v938
        %v940 = vpop.xlane.xlu0 %939
        %v941 = vsel %vm937, %v934, 0.0
        %942 = vadd.xlane.f32.xlu0 %v941
        %v943 = vpop.xlane.xlu0 %942
        %v944 = vrcp.pop 32.0
        %v945 = vmul.f32 %v940, %v944
        %v946 = vmul.f32 %v943, %v944
        %v947 = vsub.f32 %v933, %v945
        %v948 = vsub.f32 %v934, %v946
        %v949 = vmul.f32 %v947, %v947
        %v950 = vmul.f32 %v948, %v948
        %v951 = vsel %vm937, %v949, 0.0
        %952 = vadd.xlane.f32.xlu0 %v951
        %v953 = vpop.xlane.xlu0 %952
        %v954 = vsel %vm937, %v950, 0.0
        %955 = vadd.xlane.f32.xlu0 %v954
        %v956 = vpop.xlane.xlu0 %955
        %v957 = vmul.f32 %v953, %v944
        %v958 = vmul.f32 %v956, %v944
        %v959 = vadd.f32 %v957, 1e-12
        %v960 = vadd.f32 %v958, 1e-12
        %v961 = vrsqrt.pop %v959
        %v962 = vrsqrt.pop %v960
        %v963 = vmul.f32 %v947, %v961
        %v964 = vmul.f32 %v948, %v962
        %v966 = vlaneseq
        %v967 = vshrl.u32 %v966, 7
        %v968 = vsub.s32 0, %v967
        %v969 = vrot.slane %v935, %v968
        %v971 = vmul.f32 %v963, %v969
        %v972 = vmul.f32 %v964, %v969
        %v974 = vlaneseq
        %v975 = vshrl.u32 %v974, 7
        %v976 = vsub.s32 0, %v975
        %v977 = vrot.slane %v936, %v976
        %v979 = vadd.f32 %v971, %v977
        %v980 = vadd.f32 %v972, %v977
        %981 = vst.msk [vmem:[#allocation2] sm:$0xff] %vm937, %v979
        %982 = vst.msk [vmem:[#allocation2 + $0x8] sm:$0xff] %vm937, %v980
      $region120: #{bert_qa_forward.1} parent=115 // pred_fallthru
        _
      %v983 = vld [vmem:[#allocation2] sm:$0xff]
      %v984 = vld [vmem:[#allocation2 + $0x8] sm:$0xff]
      %v985 = vpack.c.bf16 %v984, %v983
      %v986 = vld [vmem:[%s880] sm:$0xf]
      %v987 = vld [vmem:[%s880 + $0x4] sm:$0xf]
      %v988 = vld [vmem:[%s880 + $0x8] sm:$0xf]
      %v989 = vld [vmem:[%s880 + $0xc] sm:$0xf]
      %v990 = vld [vmem:[%s883] sm:$0x1]
      %v992 = vlaneseq
      %v993 = vshrl.u32 %v992, 7
      %v994 = vsub.s32 0, %v993
      %v995 = vrot.slane %v990, %v994
      %v1001 = vunpack.c.l.b16 %v986
      %v1002 = vunpack.c.l.b16 %v987
      %v1003 = vunpack.c.l.b16 %v988
      %v1004 = vunpack.c.l.b16 %v989
      %v1005 = vpack.c.b16 %v1002, %v1001
      %v1006 = vpack.c.b16 %v1004, %v1003
      %vm1009 = vcmask 261120
      %v1011 = vsel %vm1009, %v985, 0
      %1013 = vmatprep.subr.bf16.mxu0 0
      %1014 = vmatpush1.bf16.msra.mxu0 0
      %1015 = vmatprep.subr.bf16.mxu0 0
      %1016 = vmatpush1.bf16.msra.mxu0 0
      %1017 = vmatprep.subr.bf16.mxu0 0
      %1018 = vmatpush1.bf16.msra.mxu0 0
      %1019 = vmatprep.subr.bf16.mxu0 0
      %1020 = vmatpush1.bf16.msra.mxu0 0
      %1021 = vmatprep.subr.bf16.mxu0 0
      %1022 = vmatpush1.bf16.msra.mxu0 0
      %1023 = vmatprep.subr.bf16.mxu0 0
      %1024 = vmatpush1.bf16.msra.mxu0 0
      %1025 = vmatprep.subr.bf16.mxu0 0
      %1026 = vmatpush1.bf16.msra.mxu0 %v1006
      %1027 = vmatprep.subr.bf16.mxu0 0
      %1028 = vmatpush1.bf16.msra.mxu0 %v1005
      %1029 = vmatprep.subr.bf16.mxu0 0
      %1030 = vmatpush2.bf16.msra.mxu0 0
      %1031 = vmatprep.subr.bf16.mxu0 0
      %1032 = vmatpush2.bf16.msra.mxu0 0
      %1033 = vmatprep.subr.bf16.mxu0 0
      %1034 = vmatpush2.bf16.msra.mxu0 0
      %1035 = vmatprep.subr.bf16.mxu0 0
      %1036 = vmatpush2.bf16.msra.mxu0 0
      %1037 = vmatprep.subr.bf16.mxu0 0
      %1038 = vmatpush2.bf16.msra.mxu0 0
      %1039 = vmatprep.subr.bf16.mxu0 0
      %1040 = vmatpush2.bf16.msra.mxu0 0
      %1041 = vmatprep.subr.bf16.mxu0 0
      %1042 = vmatpush2.bf16.msra.mxu0 0
      %1043 = vmatprep.subr.bf16.mxu0 0
      %1044 = vmatpush2.bf16.msra.mxu0 0
      %1045 = vmatprep.mubr.bf16.mxu0 0
      %1046 = vmatmul.mubr.bf16.gmra.mxu0 %v1011
      %v1047 = vpop.f32.mrf.mxu0
      %v1048 = vadd.f32 %v995, %v1047
      %v1049 = vpop.f32.mrf.mxu0
      %v1050 = vpop.f32.mrf.mxu0
      %v1051 = vadd.f32 %v995, %v1050
      %v1052 = vpop.f32.mrf.mxu0
      %1053 = vdwg.mxu0
      %v1054 = vpack.c.bf16 %v1051, %v1048
      %v1056 = vunpack.c.l.b16 %v1054
      %v1057 = vunpack.c.h.b16 %v1054
      %v1058 = vpack.c.b16 %v1056, %v1056
      %v1059 = vpack.c.b16 %v1057, %v1057
      %v1060 = vld [vmem:[%s3] sm:$0x1]
      %v1061 = vld [vmem:[%s3 + $0x1] sm:$0x1]
      %1062 = vrot.lane.b32.xlu0 %v1058, 96
      %v1063 = vpop.permute.xlu0 %1062
      %vm1064 = vcmask 130048
      %v1066 = vsel %vm1064, %v1058, 0
      %v1069 = vsel %vm1064, %v1063, 0
      %1071 = vmatprep.subr.bf16.mxu0 0
      %1072 = vmatpush1.bf16.xpose.msra.mxu0 0
      %1073 = vmatprep.subr.bf16.mxu0 0
      %1074 = vmatpush1.bf16.xpose.msra.mxu0 0
      %1075 = vmatprep.subr.bf16.mxu0 0
      %1076 = vmatpush1.bf16.xpose.msra.mxu0 0
      %1077 = vmatprep.subr.bf16.mxu0 0
      %1078 = vmatpush1.bf16.xpose.msra.mxu0 0
      %1079 = vmatprep.subr.bf16.mxu0 0
      %1080 = vmatpush1.bf16.xpose.msra.mxu0 0
      %1081 = vmatprep.subr.bf16.mxu0 0
      %1082 = vmatpush1.bf16.xpose.msra.mxu0 0
      %1083 = vmatprep.subr.bf16.mxu0 0
      %1084 = vmatpush1.bf16.xpose.msra.mxu0 0
      %1085 = vmatprep.subr.bf16.mxu0 0
      %1086 = vmatpush1.bf16.xpose.msra.mxu0 %v1069
      %1087 = vmatprep.subr.bf16.mxu0 0
      %1088 = vmatpush2.bf16.xpose.msra.mxu0 0
      %1089 = vmatprep.subr.bf16.mxu0 0
      %1090 = vmatpush2.bf16.xpose.msra.mxu0 0
      %1091 = vmatprep.subr.bf16.mxu0 0
      %1092 = vmatpush2.bf16.xpose.msra.mxu0 0
      %1093 = vmatprep.subr.bf16.mxu0 0
      %1094 = vmatpush2.bf16.xpose.msra.mxu0 0
      %1095 = vmatprep.subr.bf16.mxu0 0
      %1096 = vmatpush2.bf16.xpose.msra.mxu0 0
      %1097 = vmatprep.subr.bf16.mxu0 0
      %1098 = vmatpush2.bf16.xpose.msra.mxu0 0
      %1099 = vmatprep.subr.bf16.mxu0 0
      %1100 = vmatpush2.bf16.xpose.msra.mxu0 0
      %1101 = vmatprep.subr.bf16.mxu0 0
      %1102 = vmatpush2.bf16.xpose.msra.mxu0 0
      %1103 = vmatprep.mubr.bf16.mxu0 0
      %1104 = vmatmul.mubr.bf16.gmra.mxu0 %v1066
      %v1105 = vpop.f32.mrf.mxu0
      %v1106 = vadd.f32 0.0, %v1105
      %v1107 = vpop.f32.mrf.mxu0
      %v1108 = vpop.f32.mrf.mxu0
      %v1109 = vpop.f32.mrf.mxu0
      %1110 = vdwg.mxu0
      %1111 = vrot.lane.b32.xlu0 %v1059, 96
      %v1112 = vpop.permute.xlu0 %1111
      %v1114 = vsel %vm1064, %v1059, 0
      %v1117 = vsel %vm1064, %v1112, 0
      %1119 = vmatprep.subr.bf16.mxu0 0
      %1120 = vmatpush1.bf16.xpose.msra.mxu0 0
      %1121 = vmatprep.subr.bf16.mxu0 0
      %1122 = vmatpush1.bf16.xpose.msra.mxu0 0
      %1123 = vmatprep.subr.bf16.mxu0 0
      %1124 = vmatpush1.bf16.xpose.msra.mxu0 0
      %1125 = vmatprep.subr.bf16.mxu0 0
      %1126 = vmatpush1.bf16.xpose.msra.mxu0 0
      %1127 = vmatprep.subr.bf16.mxu0 0
      %1128 = vmatpush1.bf16.xpose.msra.mxu0 0
      %1129 = vmatprep.subr.bf16.mxu0 0
      %1130 = vmatpush1.bf16.xpose.msra.mxu0 0
      %1131 = vmatprep.subr.bf16.mxu0 0
      %1132 = vmatpush1.bf16.xpose.msra.mxu0 0
      %1133 = vmatprep.subr.bf16.mxu0 0
      %1134 = vmatpush1.bf16.xpose.msra.mxu0 %v1117
      %1135 = vmatprep.subr.bf16.mxu0 0
      %1136 = vmatpush2.bf16.xpose.msra.mxu0 0
      %1137 = vmatprep.subr.bf16.mxu0 0
      %1138 = vmatpush2.bf16.xpose.msra.mxu0 0
      %1139 = vmatprep.subr.bf16.mxu0 0
      %1140 = vmatpush2.bf16.xpose.msra.mxu0 0
      %1141 = vmatprep.subr.bf16.mxu0 0
      %1142 = vmatpush2.bf16.xpose.msra.mxu0 0
      %1143 = vmatprep.subr.bf16.mxu0 0
      %1144 = vmatpush2.bf16.xpose.msra.mxu0 0
      %1145 = vmatprep.subr.bf16.mxu0 0
      %1146 = vmatpush2.bf16.xpose.msra.mxu0 0
      %1147 = vmatprep.subr.bf16.mxu0 0
      %1148 = vmatpush2.bf16.xpose.msra.mxu0 0
      %1149 = vmatprep.subr.bf16.mxu0 0
      %1150 = vmatpush2.bf16.xpose.msra.mxu0 0
      %1151 = vmatprep.mubr.bf16.mxu0 0
      %1152 = vmatmul.mubr.bf16.gmra.mxu0 %v1114
      %v1153 = vpop.f32.mrf.mxu0
      %v1154 = vadd.f32 0.0, %v1153
      %v1155 = vpop.f32.mrf.mxu0
      %v1156 = vpop.f32.mrf.mxu0
      %v1157 = vpop.f32.mrf.mxu0
      %1158 = vdwg.mxu0
      %v1159 = vmul.f32 %v1106, 0.25
      %v1160 = vmul.f32 %v1154, 0.25
      %v1163 = vlaneseq
      %v1164 = vshrl.u32 %v1163, 7
      %v1165 = vsub.s32 0, %v1164
      %v1166 = vrot.slane %v1060, %v1165
      %v1167 = vlaneseq
      %v1168 = vshrl.u32 %v1167, 7
      %v1169 = vsub.s32 0, %v1168
      %v1170 = vrot.slane %v1061, %v1169
      %v1173 = vadd.f32 %v1159, %v1166
      %v1174 = vadd.f32 %v1160, %v1170
      %vm1175 = vcmask 64512
      %v1176 = vsel %vm1175, %v1173, -inf
      %1177 = vmax.xlane.f32.xlu0 %v1176
      %v1178 = vpop.xlane.xlu0 %1177
      %v1179 = vsel %vm1175, %v1174, -inf
      %1180 = vmax.xlane.f32.xlu0 %v1179
      %v1181 = vpop.xlane.xlu0 %1180
      %v1182 = vsub.f32 %v1173, %v1178
      %v1183 = vsub.f32 %v1174, %v1181
      %v1184 = vmul.f32 %v1182, 1.442695
      %v1185 = vpow.pop %v1184
      %v1186 = vmul.f32 %v1183, 1.442695
      %v1187 = vpow.pop %v1186
      %v1188 = vsel %vm1175, %v1185, 0.0
      %1189 = vadd.xlane.f32.xlu0 %v1188
      %v1190 = vpop.xlane.xlu0 %1189
      %v1191 = vsel %vm1175, %v1187, 0.0
      %1192 = vadd.xlane.f32.xlu0 %v1191
      %v1193 = vpop.xlane.xlu0 %1192
      %v1194 = vrcp.pop %v1190
      %v1195 = vrcp.pop %v1193
      %v1196 = vmul.f32 %v1185, %v1194
      %v1197 = vmul.f32 %v1187, %v1195
      %v1198 = vpack.c.bf16 %v1196, %v1196
      %v1199 = vpack.c.bf16 %v1197, %v1197
      %1200 = vrot.lane.b32.xlu0 %v1058, 64
      %v1201 = vpop.permute.xlu0 %1200
      %v1203 = vsel %vm1175, %v1198, 0
      %vm1205 = vcmask 1043456
      %v1207 = vsel %vm1205, %v1201, 0
      %1209 = vmatprep.subr.bf16.mxu0 0
      %1210 = vmatpush1.bf16.msra.mxu0 0
      %1211 = vmatprep.subr.bf16.mxu0 0
      %1212 = vmatpush1.bf16.msra.mxu0 0
      %1213 = vmatprep.subr.bf16.mxu0 0
      %1214 = vmatpush1.bf16.msra.mxu0 0
      %1215 = vmatprep.subr.bf16.mxu0 0
      %1216 = vmatpush1.bf16.msra.mxu0 0
      %1217 = vmatprep.subr.bf16.mxu0 0
      %1218 = vmatpush1.bf16.msra.mxu0 0
      %1219 = vmatprep.subr.bf16.mxu0 0
      %1220 = vmatpush1.bf16.msra.mxu0 0
      %1221 = vmatprep.subr.bf16.mxu0 0
      %1222 = vmatpush1.bf16.msra.mxu0 0
      %1223 = vmatprep.subr.bf16.mxu0 0
      %1224 = vmatpush1.bf16.msra.mxu0 %v1207
      %1225 = vmatprep.subr.bf16.mxu0 0
      %1226 = vmatpush2.bf16.msra.mxu0 0
      %1227 = vmatprep.subr.bf16.mxu0 0
      %1228 = vmatpush2.bf16.msra.mxu0 0
      %1229 = vmatprep.subr.bf16.mxu0 0
      %1230 = vmatpush2.bf16.msra.mxu0 0
      %1231 = vmatprep.subr.bf16.mxu0 0
      %1232 = vmatpush2.bf16.msra.mxu0 0
      %1233 = vmatprep.subr.bf16.mxu0 0
      %1234 = vmatpush2.bf16.msra.mxu0 0
      %1235 = vmatprep.subr.bf16.mxu0 0
      %1236 = vmatpush2.bf16.msra.mxu0 0
      %1237 = vmatprep.subr.bf16.mxu0 0
      %1238 = vmatpush2.bf16.msra.mxu0 0
      %1239 = vmatprep.subr.bf16.mxu0 0
      %1240 = vmatpush2.bf16.msra.mxu0 0
      %1241 = vmatprep.mubr.bf16.mxu0 0
      %1242 = vmatmul.mubr.bf16.gmra.mxu0 %v1203
      %v1243 = vpop.f32.mrf.mxu0
      %v1244 = vadd.f32 0.0, %v1243
      %v1245 = vpop.f32.mrf.mxu0
      %v1246 = vpop.f32.mrf.mxu0
      %v1247 = vpop.f32.mrf.mxu0
      %1248 = vdwg.mxu0
      %1249 = vrot.lane.b32.xlu0 %v1059, 64
      %v1250 = vpop.permute.xlu0 %1249
      %v1252 = vsel %vm1175, %v1199, 0
      %v1255 = vsel %vm1205, %v1250, 0
      %1257 = vmatprep.subr.bf16.mxu0 0
      %1258 = vmatpush1.bf16.msra.mxu0 0
      %1259 = vmatprep.subr.bf16.mxu0 0
      %1260 = vmatpush1.bf16.msra.mxu0 0
      %1261 = vmatprep.subr.bf16.mxu0 0
      %1262 = vmatpush1.bf16.msra.mxu0 0
      %1263 = vmatprep.subr.bf16.mxu0 0
      %1264 = vmatpush1.bf16.msra.mxu0 0
      %1265 = vmatprep.subr.bf16.mxu0 0
      %1266 = vmatpush1.bf16.msra.mxu0 0
      %1267 = vmatprep.subr.bf16.mxu0 0
      %1268 = vmatpush1.bf16.msra.mxu0 0
      %1269 = vmatprep.subr.bf16.mxu0 0
      %1270 = vmatpush1.bf16.msra.mxu0 0
      %1271 = vmatprep.subr.bf16.mxu0 0
      %1272 = vmatpush1.bf16.msra.mxu0 %v1255
      %1273 = vmatprep.subr.bf16.mxu0 0
      %1274 = vmatpush2.bf16.msra.mxu0 0
      %1275 = vmatprep.subr.bf16.mxu0 0
      %1276 = vmatpush2.bf16.msra.mxu0 0
      %1277 = vmatprep.subr.bf16.mxu0 0
      %1278 = vmatpush2.bf16.msra.mxu0 0
      %1279 = vmatprep.subr.bf16.mxu0 0
      %1280 = vmatpush2.bf16.msra.mxu0 0
      %1281 = vmatprep.subr.bf16.mxu0 0
      %1282 = vmatpush2.bf16.msra.mxu0 0
      %1283 = vmatprep.subr.bf16.mxu0 0
      %1284 = vmatpush2.bf16.msra.mxu0 0
      %1285 = vmatprep.subr.bf16.mxu0 0
      %1286 = vmatpush2.bf16.msra.mxu0 0
      %1287 = vmatprep.subr.bf16.mxu0 0
      %1288 = vmatpush2.bf16.msra.mxu0 0
      %1289 = vmatprep.mubr.bf16.mxu0 0
      %1290 = vmatmul.mubr.bf16.gmra.mxu0 %v1252
      %v1291 = vpop.f32.mrf.mxu0
      %v1292 = vadd.f32 0.0, %v1291
      %v1293 = vpop.f32.mrf.mxu0
      %v1294 = vpop.f32.mrf.mxu0
      %v1295 = vpop.f32.mrf.mxu0
      %1296 = vdwg.mxu0
      %1297 = vrot.lane.b32.xlu0 %v1058, 112
      %v1298 = vpop.permute.xlu0 %1297
      %1299 = vrot.lane.b32.xlu0 %v1058, 80
      %v1300 = vpop.permute.xlu0 %1299
      %v1302 = vsel %vm1064, %v1298, 0
      %v1305 = vsel %vm1064, %v1300, 0
      %1307 = vmatprep.subr.bf16.mxu0 0
      %1308 = vmatpush1.bf16.xpose.msra.mxu0 0
      %1309 = vmatprep.subr.bf16.mxu0 0
      %1310 = vmatpush1.bf16.xpose.msra.mxu0 0
      %1311 = vmatprep.subr.bf16.mxu0 0
      %1312 = vmatpush1.bf16.xpose.msra.mxu0 0
      %1313 = vmatprep.subr.bf16.mxu0 0
      %1314 = vmatpush1.bf16.xpose.msra.mxu0 0
      %1315 = vmatprep.subr.bf16.mxu0 0
      %1316 = vmatpush1.bf16.xpose.msra.mxu0 0
      %1317 = vmatprep.subr.bf16.mxu0 0
      %1318 = vmatpush1.bf16.xpose.msra.mxu0 0
      %1319 = vmatprep.subr.bf16.mxu0 0
      %1320 = vmatpush1.bf16.xpose.msra.mxu0 0
      %1321 = vmatprep.subr.bf16.mxu0 0
      %1322 = vmatpush1.bf16.xpose.msra.mxu0 %v1305
      %1323 = vmatprep.subr.bf16.mxu0 0
      %1324 = vmatpush2.bf16.xpose.msra.mxu0 0
      %1325 = vmatprep.subr.bf16.mxu0 0
      %1326 = vmatpush2.bf16.xpose.msra.mxu0 0
      %1327 = vmatprep.subr.bf16.mxu0 0
      %1328 = vmatpush2.bf16.xpose.msra.mxu0 0
      %1329 = vmatprep.subr.bf16.mxu0 0
      %1330 = vmatpush2.bf16.xpose.msra.mxu0 0
      %1331 = vmatprep.subr.bf16.mxu0 0
      %1332 = vmatpush2.bf16.xpose.msra.mxu0 0
      %1333 = vmatprep.subr.bf16.mxu0 0
      %1334 = vmatpush2.bf16.xpose.msra.mxu0 0
      %1335 = vmatprep.subr.bf16.mxu0 0
      %1336 = vmatpush2.bf16.xpose.msra.mxu0 0
      %1337 = vmatprep.subr.bf16.mxu0 0
      %1338 = vmatpush2.bf16.xpose.msra.mxu0 0
      %1339 = vmatprep.mubr.bf16.mxu0 0
      %1340 = vmatmul.mubr.bf16.gmra.mxu0 %v1302
      %v1341 = vpop.f32.mrf.mxu0
      %v1342 = vadd.f32 0.0, %v1341
      %v1343 = vpop.f32.mrf.mxu0
      %v1344 = vpop.f32.mrf.mxu0
      %v1345 = vpop.f32.mrf.mxu0
      %1346 = vdwg.mxu0
      %1347 = vrot.lane.b32.xlu0 %v1059, 112
      %v1348 = vpop.permute.xlu0 %1347
      %1349 = vrot.lane.b32.xlu0 %v1059, 80
      %v1350 = vpop.permute.xlu0 %1349
      %v1352 = vsel %vm1064, %v1348, 0
      %v1355 = vsel %vm1064, %v1350, 0
      %1357 = vmatprep.subr.bf16.mxu0 0
      %1358 = vmatpush1.bf16.xpose.msra.mxu0 0
      %1359 = vmatprep.subr.bf16.mxu0 0
      %1360 = vmatpush1.bf16.xpose.msra.mxu0 0
      %1361 = vmatprep.subr.bf16.mxu0 0
      %1362 = vmatpush1.bf16.xpose.msra.mxu0 0
      %1363 = vmatprep.subr.bf16.mxu0 0
      %1364 = vmatpush1.bf16.xpose.msra.mxu0 0
      %1365 = vmatprep.subr.bf16.mxu0 0
      %1366 = vmatpush1.bf16.xpose.msra.mxu0 0
      %1367 = vmatprep.subr.bf16.mxu0 0
      %1368 = vmatpush1.bf16.xpose.msra.mxu0 0
      %1369 = vmatprep.subr.bf16.mxu0 0
      %1370 = vmatpush1.bf16.xpose.msra.mxu0 0
      %1371 = vmatprep.subr.bf16.mxu0 0
      %1372 = vmatpush1.bf16.xpose.msra.mxu0 %v1355
      %1373 = vmatprep.subr.bf16.mxu0 0
      %1374 = vmatpush2.bf16.xpose.msra.mxu0 0
      %1375 = vmatprep.subr.bf16.mxu0 0
      %1376 = vmatpush2.bf16.xpose.msra.mxu0 0
      %1377 = vmatprep.subr.bf16.mxu0 0
      %1378 = vmatpush2.bf16.xpose.msra.mxu0 0
      %1379 = vmatprep.subr.bf16.mxu0 0
      %1380 = vmatpush2.bf16.xpose.msra.mxu0 0
      %1381 = vmatprep.subr.bf16.mxu0 0
      %1382 = vmatpush2.bf16.xpose.msra.mxu0 0
      %1383 = vmatprep.subr.bf16.mxu0 0
      %1384 = vmatpush2.bf16.xpose.msra.mxu0 0
      %1385 = vmatprep.subr.bf16.mxu0 0
      %1386 = vmatpush2.bf16.xpose.msra.mxu0 0
      %1387 = vmatprep.subr.bf16.mxu0 0
      %1388 = vmatpush2.bf16.xpose.msra.mxu0 0
      %1389 = vmatprep.mubr.bf16.mxu0 0
      %1390 = vmatmul.mubr.bf16.gmra.mxu0 %v1352
      %v1391 = vpop.f32.mrf.mxu0
      %v1392 = vadd.f32 0.0, %v1391
      %v1393 = vpop.f32.mrf.mxu0
      %v1394 = vpop.f32.mrf.mxu0
      %v1395 = vpop.f32.mrf.mxu0
      %1396 = vdwg.mxu0
      %v1397 = vmul.f32 %v1342, 0.25
      %v1398 = vmul.f32 %v1392, 0.25
      %v1399 = vadd.f32 %v1397, %v1166
      %v1400 = vadd.f32 %v1398, %v1170
      %v1401 = vsel %vm1175, %v1399, -inf
      %1402 = vmax.xlane.f32.xlu0 %v1401
      %v1403 = vpop.xlane.xlu0 %1402
      %v1404 = vsel %vm1175, %v1400, -inf
      %1405 = vmax.xlane.f32.xlu0 %v1404
      %v1406 = vpop.xlane.xlu0 %1405
      %v1407 = vsub.f32 %v1399, %v1403
      %v1408 = vsub.f32 %v1400, %v1406
      %v1409 = vmul.f32 %v1407, 1.442695
      %v1410 = vpow.pop %v1409
      %v1411 = vmul.f32 %v1408, 1.442695
      %v1412 = vpow.pop %v1411
      %v1413 = vsel %vm1175, %v1410, 0.0
      %1414 = vadd.xlane.f32.xlu0 %v1413
      %v1415 = vpop.xlane.xlu0 %1414
      %v1416 = vsel %vm1175, %v1412, 0.0
      %1417 = vadd.xlane.f32.xlu0 %v1416
      %v1418 = vpop.xlane.xlu0 %1417
      %v1419 = vrcp.pop %v1415
      %v1420 = vrcp.pop %v1418
      %v1421 = vmul.f32 %v1410, %v1419
      %v1422 = vmul.f32 %v1412, %v1420
      %v1423 = vpack.c.bf16 %v1421, %v1421
      %v1424 = vpack.c.bf16 %v1422, %v1422
      %1425 = vrot.lane.b32.xlu0 %v1058, 48
      %v1426 = vpop.permute.xlu0 %1425
      %v1428 = vsel %vm1175, %v1423, 0
      %v1431 = vsel %vm1205, %v1426, 0
      %1433 = vmatprep.subr.bf16.mxu0 0
      %1434 = vmatpush1.bf16.msra.mxu0 0
      %1435 = vmatprep.subr.bf16.mxu0 0
      %1436 = vmatpush1.bf16.msra.mxu0 0
      %1437 = vmatprep.subr.bf16.mxu0 0
      %1438 = vmatpush1.bf16.msra.mxu0 0
      %1439 = vmatprep.subr.bf16.mxu0 0
      %1440 = vmatpush1.bf16.msra.mxu0 0
      %1441 = vmatprep.subr.bf16.mxu0 0
      %1442 = vmatpush1.bf16.msra.mxu0 0
      %1443 = vmatprep.subr.bf16.mxu0 0
      %1444 = vmatpush1.bf16.msra.mxu0 0
      %1445 = vmatprep.subr.bf16.mxu0 0
      %1446 = vmatpush1.bf16.msra.mxu0 0
      %1447 = vmatprep.subr.bf16.mxu0 0
      %1448 = vmatpush1.bf16.msra.mxu0 %v1431
      %1449 = vmatprep.subr.bf16.mxu0 0
      %1450 = vmatpush2.bf16.msra.mxu0 0
      %1451 = vmatprep.subr.bf16.mxu0 0
      %1452 = vmatpush2.bf16.msra.mxu0 0
      %1453 = vmatprep.subr.bf16.mxu0 0
      %1454 = vmatpush2.bf16.msra.mxu0 0
      %1455 = vmatprep.subr.bf16.mxu0 0
      %1456 = vmatpush2.bf16.msra.mxu0 0
      %1457 = vmatprep.subr.bf16.mxu0 0
      %1458 = vmatpush2.bf16.msra.mxu0 0
      %1459 = vmatprep.subr.bf16.mxu0 0
      %1460 = vmatpush2.bf16.msra.mxu0 0
      %1461 = vmatprep.subr.bf16.mxu0 0
      %1462 = vmatpush2.bf16.msra.mxu0 0
      %1463 = vmatprep.subr.bf16.mxu0 0
      %1464 = vmatpush2.bf16.msra.mxu0 0
      %1465 = vmatprep.mubr.bf16.mxu0 0
      %1466 = vmatmul.mubr.bf16.gmra.mxu0 %v1428
      %v1467 = vpop.f32.mrf.mxu0
      %v1468 = vadd.f32 0.0, %v1467
      %v1469 = vpop.f32.mrf.mxu0
      %v1470 = vpop.f32.mrf.mxu0
      %v1471 = vpop.f32.mrf.mxu0
      %1472 = vdwg.mxu0
      %1473 = vrot.lane.b32.xlu0 %v1059, 48
      %v1474 = vpop.permute.xlu0 %1473
      %v1476 = vsel %vm1175, %v1424, 0
      %v1479 = vsel %vm1205, %v1474, 0
      %1481 = vmatprep.subr.bf16.mxu0 0
      %1482 = vmatpush1.bf16.msra.mxu0 0
      %1483 = vmatprep.subr.bf16.mxu0 0
      %1484 = vmatpush1.bf16.msra.mxu0 0
      %1485 = vmatprep.subr.bf16.mxu0 0
      %1486 = vmatpush1.bf16.msra.mxu0 0
      %1487 = vmatprep.subr.bf16.mxu0 0
      %1488 = vmatpush1.bf16.msra.mxu0 0
      %1489 = vmatprep.subr.bf16.mxu0 0
      %1490 = vmatpush1.bf16.msra.mxu0 0
      %1491 = vmatprep.subr.bf16.mxu0 0
      %1492 = vmatpush1.bf16.msra.mxu0 0
      %1493 = vmatprep.subr.bf16.mxu0 0
      %1494 = vmatpush1.bf16.msra.mxu0 0
      %1495 = vmatprep.subr.bf16.mxu0 0
      %1496 = vmatpush1.bf16.msra.mxu0 %v1479
      %1497 = vmatprep.subr.bf16.mxu0 0
      %1498 = vmatpush2.bf16.msra.mxu0 0
      %1499 = vmatprep.subr.bf16.mxu0 0
      %1500 = vmatpush2.bf16.msra.mxu0 0
      %1501 = vmatprep.subr.bf16.mxu0 0
      %1502 = vmatpush2.bf16.msra.mxu0 0
      %1503 = vmatprep.subr.bf16.mxu0 0
      %1504 = vmatpush2.bf16.msra.mxu0 0
      %1505 = vmatprep.subr.bf16.mxu0 0
      %1506 = vmatpush2.bf16.msra.mxu0 0
      %1507 = vmatprep.subr.bf16.mxu0 0
      %1508 = vmatpush2.bf16.msra.mxu0 0
      %1509 = vmatprep.subr.bf16.mxu0 0
      %1510 = vmatpush2.bf16.msra.mxu0 0
      %1511 = vmatprep.subr.bf16.mxu0 0
      %1512 = vmatpush2.bf16.msra.mxu0 0
      %1513 = vmatprep.mubr.bf16.mxu0 0
      %1514 = vmatmul.mubr.bf16.gmra.mxu0 %v1476
      %v1515 = vpop.f32.mrf.mxu0
      %v1516 = vadd.f32 0.0, %v1515
      %v1517 = vpop.f32.mrf.mxu0
      %v1518 = vpop.f32.mrf.mxu0
      %v1519 = vpop.f32.mrf.mxu0
      %1520 = vdwg.mxu0
      %1523 = vrot.lane.b32.xlu0 %v1468, 16
      %v1524 = vpop.permute.xlu0 %1523
      %1525 = vrot.lane.b32.xlu0 %v1516, 16
      %v1526 = vpop.permute.xlu0 %1525
      %v1529 = vsel %vm1064, %v1244, %v1524
      %v1530 = vsel %vm1064, %v1292, %v1526
      %v1531 = vpack.c.bf16 %v1530, %v1529
      %v1532 = vld [vmem:[%s888] sm:$0xf]
      %v1533 = vld [vmem:[%s888 + $0x4] sm:$0xf]
      %v1534 = vld [vmem:[%s888 + $0x8] sm:$0xf]
      %v1535 = vld [vmem:[%s888 + $0xc] sm:$0xf]
      %v1536 = vld [vmem:[%s891] sm:$0x1]
      %v1538 = vlaneseq
      %v1539 = vshrl.u32 %v1538, 7
      %v1540 = vsub.s32 0, %v1539
      %v1541 = vrot.slane %v1536, %v1540
      %v1547 = vunpack.c.l.b16 %v1532
      %v1548 = vunpack.c.l.b16 %v1533
      %v1549 = vunpack.c.l.b16 %v1534
      %v1550 = vunpack.c.l.b16 %v1535
      %v1551 = vpack.c.b16 %v1548, %v1547
      %v1552 = vpack.c.b16 %v1550, %v1549
      %v1556 = vsel %vm1009, %v1531, 0
      %1558 = vmatprep.subr.bf16.mxu0 0
      %1559 = vmatpush1.bf16.msra.mxu0 0
      %1560 = vmatprep.subr.bf16.mxu0 0
      %1561 = vmatpush1.bf16.msra.mxu0 0
      %1562 = vmatprep.subr.bf16.mxu0 0
      %1563 = vmatpush1.bf16.msra.mxu0 0
      %1564 = vmatprep.subr.bf16.mxu0 0
      %1565 = vmatpush1.bf16.msra.mxu0 0
      %1566 = vmatprep.subr.bf16.mxu0 0
      %1567 = vmatpush1.bf16.msra.mxu0 0
      %1568 = vmatprep.subr.bf16.mxu0 0
      %1569 = vmatpush1.bf16.msra.mxu0 0
      %1570 = vmatprep.subr.bf16.mxu0 0
      %1571 = vmatpush1.bf16.msra.mxu0 %v1552
      %1572 = vmatprep.subr.bf16.mxu0 0
      %1573 = vmatpush1.bf16.msra.mxu0 %v1551
      %1574 = vmatprep.subr.bf16.mxu0 0
      %1575 = vmatpush2.bf16.msra.mxu0 0
      %1576 = vmatprep.subr.bf16.mxu0 0
      %1577 = vmatpush2.bf16.msra.mxu0 0
      %1578 = vmatprep.subr.bf16.mxu0 0
      %1579 = vmatpush2.bf16.msra.mxu0 0
      %1580 = vmatprep.subr.bf16.mxu0 0
      %1581 = vmatpush2.bf16.msra.mxu0 0
      %1582 = vmatprep.subr.bf16.mxu0 0
      %1583 = vmatpush2.bf16.msra.mxu0 0
      %1584 = vmatprep.subr.bf16.mxu0 0
      %1585 = vmatpush2.bf16.msra.mxu0 0
      %1586 = vmatprep.subr.bf16.mxu0 0
      %1587 = vmatpush2.bf16.msra.mxu0 0
      %1588 = vmatprep.subr.bf16.mxu0 0
      %1589 = vmatpush2.bf16.msra.mxu0 0
      %1590 = vmatprep.mubr.bf16.mxu0 0
      %1591 = vmatmul.mubr.bf16.gmra.mxu0 %v1556
      %v1592 = vpop.f32.mrf.mxu0
      %v1593 = vadd.f32 %v1541, %v1592
      %v1594 = vpop.f32.mrf.mxu0
      %v1595 = vpop.f32.mrf.mxu0
      %v1596 = vadd.f32 %v1541, %v1595
      %v1597 = vpop.f32.mrf.mxu0
      %1598 = vdwg.mxu0
      %v1599 = vadd.f32 %v1593, %v983
      %v1600 = vadd.f32 %v1596, %v984
      %v1601 = vld [vmem:[%s894] sm:$0x1]
      %v1602 = vld [vmem:[%s897] sm:$0x1]
      %v1603 = vsel %vm1009, %v1599, 0.0
      %1604 = vadd.xlane.f32.xlu0 %v1603
      %v1605 = vpop.xlane.xlu0 %1604
      %v1606 = vsel %vm1009, %v1600, 0.0
      %1607 = vadd.xlane.f32.xlu0 %v1606
      %v1608 = vpop.xlane.xlu0 %1607
      %v1609 = vrcp.pop 32.0
      %v1610 = vmul.f32 %v1605, %v1609
      %v1611 = vmul.f32 %v1608, %v1609
      %v1612 = vsub.f32 %v1599, %v1610
      %v1613 = vsub.f32 %v1600, %v1611
      %v1614 = vmul.f32 %v1612, %v1612
      %v1615 = vmul.f32 %v1613, %v1613
      %v1616 = vsel %vm1009, %v1614, 0.0
      %1617 = vadd.xlane.f32.xlu0 %v1616
      %v1618 = vpop.xlane.xlu0 %1617
      %v1619 = vsel %vm1009, %v1615, 0.0
      %1620 = vadd.xlane.f32.xlu0 %v1619
      %v1621 = vpop.xlane.xlu0 %1620
      %v1622 = vmul.f32 %v1618, %v1609
      %v1623 = vmul.f32 %v1621, %v1609
      %v1624 = vadd.f32 %v1622, 1e-12
      %v1625 = vadd.f32 %v1623, 1e-12
      %v1626 = vrsqrt.pop %v1624
      %v1627 = vrsqrt.pop %v1625
      %v1628 = vmul.f32 %v1612, %v1626
      %v1629 = vmul.f32 %v1613, %v1627
      %v1631 = vlaneseq
      %v1632 = vshrl.u32 %v1631, 7
      %v1633 = vsub.s32 0, %v1632
      %v1634 = vrot.slane %v1601, %v1633
      %v1636 = vmul.f32 %v1628, %v1634
      %v1637 = vmul.f32 %v1629, %v1634
      %v1639 = vlaneseq
      %v1640 = vshrl.u32 %v1639, 7
      %v1641 = vsub.s32 0, %v1640
      %v1642 = vrot.slane %v1602, %v1641
      %v1644 = vadd.f32 %v1636, %v1642
      %v1645 = vadd.f32 %v1637, %v1642
      %v1646 = vpack.c.bf16 %v1645, %v1644
      %v1647 = vld [vmem:[%s902] sm:$0xf]
      %v1648 = vld [vmem:[%s902 + $0x4] sm:$0xf]
      %v1649 = vld [vmem:[%s902 + $0x8] sm:$0xf]
      %v1650 = vld [vmem:[%s902 + $0xc] sm:$0xf]
      %v1651 = vld [vmem:[%s905] sm:$0x1]
      %v1653 = vlaneseq
      %v1654 = vshrl.u32 %v1653, 7
      %v1655 = vsub.s32 0, %v1654
      %v1656 = vrot.slane %v1651, %v1655
      %v1662 = vunpack.c.l.b16 %v1647
      %v1663 = vunpack.c.l.b16 %v1648
      %v1664 = vunpack.c.l.b16 %v1649
      %v1665 = vunpack.c.l.b16 %v1650
      %v1666 = vpack.c.b16 %v1663, %v1662
      %v1667 = vpack.c.b16 %v1665, %v1664
      %v1671 = vsel %vm1009, %v1646, 0
      %1673 = vmatprep.subr.bf16.mxu0 0
      %1674 = vmatpush1.bf16.msra.mxu0 0
      %1675 = vmatprep.subr.bf16.mxu0 0
      %1676 = vmatpush1.bf16.msra.mxu0 0
      %1677 = vmatprep.subr.bf16.mxu0 0
      %1678 = vmatpush1.bf16.msra.mxu0 0
      %1679 = vmatprep.subr.bf16.mxu0 0
      %1680 = vmatpush1.bf16.msra.mxu0 0
      %1681 = vmatprep.subr.bf16.mxu0 0
      %1682 = vmatpush1.bf16.msra.mxu0 0
      %1683 = vmatprep.subr.bf16.mxu0 0
      %1684 = vmatpush1.bf16.msra.mxu0 0
      %1685 = vmatprep.subr.bf16.mxu0 0
      %1686 = vmatpush1.bf16.msra.mxu0 %v1667
      %1687 = vmatprep.subr.bf16.mxu0 0
      %1688 = vmatpush1.bf16.msra.mxu0 %v1666
      %1689 = vmatprep.subr.bf16.mxu0 0
      %1690 = vmatpush2.bf16.msra.mxu0 0
      %1691 = vmatprep.subr.bf16.mxu0 0
      %1692 = vmatpush2.bf16.msra.mxu0 0
      %1693 = vmatprep.subr.bf16.mxu0 0
      %1694 = vmatpush2.bf16.msra.mxu0 0
      %1695 = vmatprep.subr.bf16.mxu0 0
      %1696 = vmatpush2.bf16.msra.mxu0 0
      %1697 = vmatprep.subr.bf16.mxu0 0
      %1698 = vmatpush2.bf16.msra.mxu0 0
      %1699 = vmatprep.subr.bf16.mxu0 0
      %1700 = vmatpush2.bf16.msra.mxu0 0
      %1701 = vmatprep.subr.bf16.mxu0 0
      %1702 = vmatpush2.bf16.msra.mxu0 0
      %1703 = vmatprep.subr.bf16.mxu0 0
      %1704 = vmatpush2.bf16.msra.mxu0 0
      %1705 = vmatprep.mubr.bf16.mxu0 0
      %1706 = vmatmul.mubr.bf16.gmra.mxu0 %v1671
      %v1707 = vpop.f32.mrf.mxu0
      %v1708 = vadd.f32 %v1656, %v1707
      %v1709 = vpop.f32.mrf.mxu0
      %v1710 = vpop.f32.mrf.mxu0
      %v1711 = vadd.f32 %v1656, %v1710
      %v1712 = vpop.f32.mrf.mxu0
      %1713 = vdwg.mxu0
      %v1714 = vmul.f32 %v1708, %v1708
      %v1715 = vmul.f32 %v1711, %v1711
      %v1716 = vmul.f32 %v1708, %v1714
      %v1717 = vmul.f32 %v1711, %v1715
      %v1718 = vmul.f32 %v1716, 0.044715
      %v1719 = vmul.f32 %v1717, 0.044715
      %v1720 = vadd.f32 %v1708, %v1718
      %v1721 = vadd.f32 %v1711, %v1719
      %v1722 = vmul.f32 %v1720, 0.7978846
      %v1723 = vmul.f32 %v1721, 0.7978846
      %v1724 = vtanh.pop %v1722
      %v1725 = vtanh.pop %v1723
      %v1726 = vadd.f32 %v1724, 1.0
      %v1727 = vadd.f32 %v1725, 1.0
      %v1728 = vmul.f32 %v1726, 0.5
      %v1729 = vmul.f32 %v1727, 0.5
      %v1730 = vmul.f32 %v1708, %v1728
      %v1731 = vmul.f32 %v1711, %v1729
      %v1732 = vpack.c.bf16 %v1731, %v1730
      %v1733 = vld [vmem:[%s910] sm:$0xf]
      %v1734 = vld [vmem:[%s910 + $0x4] sm:$0xf]
      %v1735 = vld [vmem:[%s910 + $0x8] sm:$0xf]
      %v1736 = vld [vmem:[%s910 + $0xc] sm:$0xf]
      %v1737 = vld [vmem:[%s910 + $0x10] sm:$0xf]
      %v1738 = vld [vmem:[%s910 + $0x14] sm:$0xf]
      %v1739 = vld [vmem:[%s910 + $0x18] sm:$0xf]
      %v1740 = vld [vmem:[%s910 + $0x1c] sm:$0xf]
      %v1741 = vld [vmem:[%s913] sm:$0x1]
      %v1743 = vlaneseq
      %v1744 = vshrl.u32 %v1743, 7
      %v1745 = vsub.s32 0, %v1744
      %v1746 = vrot.slane %v1741, %v1745
      %v1756 = vunpack.c.l.b16 %v1733
      %v1757 = vunpack.c.l.b16 %v1734
      %v1758 = vunpack.c.l.b16 %v1735
      %v1759 = vunpack.c.l.b16 %v1736
      %v1760 = vunpack.c.l.b16 %v1737
      %v1761 = vunpack.c.l.b16 %v1738
      %v1762 = vunpack.c.l.b16 %v1739
      %v1763 = vunpack.c.l.b16 %v1740
      %v1764 = vpack.c.b16 %v1757, %v1756
      %v1765 = vpack.c.b16 %v1759, %v1758
      %v1766 = vpack.c.b16 %v1761, %v1760
      %v1767 = vpack.c.b16 %v1763, %v1762
      %vm1772 = vcmask 523264
      %v1774 = vsel %vm1772, %v1732, 0
      %1776 = vmatprep.subr.bf16.mxu0 0
      %1777 = vmatpush1.bf16.msra.mxu0 0
      %1778 = vmatprep.subr.bf16.mxu0 0
      %1779 = vmatpush1.bf16.msra.mxu0 0
      %1780 = vmatprep.subr.bf16.mxu0 0
      %1781 = vmatpush1.bf16.msra.mxu0 0
      %1782 = vmatprep.subr.bf16.mxu0 0
      %1783 = vmatpush1.bf16.msra.mxu0 0
      %1784 = vmatprep.subr.bf16.mxu0 0
      %1785 = vmatpush1.bf16.msra.mxu0 %v1767
      %1786 = vmatprep.subr.bf16.mxu0 0
      %1787 = vmatpush1.bf16.msra.mxu0 %v1766
      %1788 = vmatprep.subr.bf16.mxu0 0
      %1789 = vmatpush1.bf16.msra.mxu0 %v1765
      %1790 = vmatprep.subr.bf16.mxu0 0
      %1791 = vmatpush1.bf16.msra.mxu0 %v1764
      %1792 = vmatprep.subr.bf16.mxu0 0
      %1793 = vmatpush2.bf16.msra.mxu0 0
      %1794 = vmatprep.subr.bf16.mxu0 0
      %1795 = vmatpush2.bf16.msra.mxu0 0
      %1796 = vmatprep.subr.bf16.mxu0 0
      %1797 = vmatpush2.bf16.msra.mxu0 0
      %1798 = vmatprep.subr.bf16.mxu0 0
      %1799 = vmatpush2.bf16.msra.mxu0 0
      %1800 = vmatprep.subr.bf16.mxu0 0
      %1801 = vmatpush2.bf16.msra.mxu0 0
      %1802 = vmatprep.subr.bf16.mxu0 0
      %1803 = vmatpush2.bf16.msra.mxu0 0
      %1804 = vmatprep.subr.bf16.mxu0 0
      %1805 = vmatpush2.bf16.msra.mxu0 0
      %1806 = vmatprep.subr.bf16.mxu0 0
      %1807 = vmatpush2.bf16.msra.mxu0 0
      %1808 = vmatprep.mubr.bf16.mxu0 0
      %1809 = vmatmul.mubr.bf16.gmra.mxu0 %v1774
      %v1810 = vpop.f32.mrf.mxu0
      %v1811 = vadd.f32 %v1746, %v1810
      %v1812 = vpop.f32.mrf.mxu0
      %v1813 = vpop.f32.mrf.mxu0
      %v1814 = vadd.f32 %v1746, %v1813
      %v1815 = vpop.f32.mrf.mxu0
      %1816 = vdwg.mxu0
      %v1817 = vadd.f32 %v1811, %v1644
      %v1818 = vadd.f32 %v1814, %v1645
      %v1819 = vld [vmem:[%s916] sm:$0x1]
      %v1820 = vld [vmem:[%s919] sm:$0x1]
      %v1821 = vsel %vm1009, %v1817, 0.0
      %1822 = vadd.xlane.f32.xlu0 %v1821
      %v1823 = vpop.xlane.xlu0 %1822
      %v1824 = vsel %vm1009, %v1818, 0.0
      %1825 = vadd.xlane.f32.xlu0 %v1824
      %v1826 = vpop.xlane.xlu0 %1825
      %v1827 = vmul.f32 %v1823, %v1609
      %v1828 = vmul.f32 %v1826, %v1609
      %v1829 = vsub.f32 %v1817, %v1827
      %v1830 = vsub.f32 %v1818, %v1828
      %v1831 = vmul.f32 %v1829, %v1829
      %v1832 = vmul.f32 %v1830, %v1830
      %v1833 = vsel %vm1009, %v1831, 0.0
      %1834 = vadd.xlane.f32.xlu0 %v1833
      %v1835 = vpop.xlane.xlu0 %1834
      %v1836 = vsel %vm1009, %v1832, 0.0
      %1837 = vadd.xlane.f32.xlu0 %v1836
      %v1838 = vpop.xlane.xlu0 %1837
      %v1839 = vmul.f32 %v1835, %v1609
      %v1840 = vmul.f32 %v1838, %v1609
      %v1841 = vadd.f32 %v1839, 1e-12
      %v1842 = vadd.f32 %v1840, 1e-12
      %v1843 = vrsqrt.pop %v1841
      %v1844 = vrsqrt.pop %v1842
      %v1845 = vmul.f32 %v1829, %v1843
      %v1846 = vmul.f32 %v1830, %v1844
      %v1848 = vlaneseq
      %v1849 = vshrl.u32 %v1848, 7
      %v1850 = vsub.s32 0, %v1849
      %v1851 = vrot.slane %v1819, %v1850
      %v1853 = vmul.f32 %v1845, %v1851
      %v1854 = vmul.f32 %v1846, %v1851
      %v1856 = vlaneseq
      %v1857 = vshrl.u32 %v1856, 7
      %v1858 = vsub.s32 0, %v1857
      %v1859 = vrot.slane %v1820, %v1858
      %v1861 = vadd.f32 %v1853, %v1859
      %v1862 = vadd.f32 %v1854, %v1859
      %1863 = vst.msk [vmem:[#allocation2] sm:$0xff] %vm1009, %v1861
      %1864 = vst.msk [vmem:[#allocation2 + $0x8] sm:$0xff] %vm1009, %v1862
      %p1865 = scmp.eq.s32.totalorder %s37, 1
      // Predicated region
      $region121: #{bert_qa_forward.1} parent=115 // pred_check
        %p1866 = pneg %p1865
      $region122: #{bert_qa_forward.1} parent=115 // pred_check_branch
        %1868 = sbr.rel (%p1866) target = $region124
      $region123: #{bert_qa_forward.1} parent=115 // pred_region
        %v1869 = vpack.c.bf16 %v1862, %v1861
        %v1870 = vld [vmem:[%s20] sm:$0xf]
        %v1871 = vld [vmem:[%s20 + $0x4] sm:$0xf]
        %v1872 = vld [vmem:[%s20 + $0x8] sm:$0xf]
        %v1873 = vld [vmem:[%s20 + $0xc] sm:$0xf]
        %v1874 = vld [vmem:[%s21] sm:$0x1]
        %v1876 = vlaneseq
        %v1877 = vshrl.u32 %v1876, 7
        %v1878 = vsub.s32 0, %v1877
        %v1879 = vrot.slane %v1874, %v1878
        %v1885 = vunpack.c.l.b16 %v1870
        %v1886 = vunpack.c.l.b16 %v1871
        %v1887 = vunpack.c.l.b16 %v1872
        %v1888 = vunpack.c.l.b16 %v1873
        %v1889 = vpack.c.b16 %v1886, %v1885
        %v1890 = vpack.c.b16 %v1888, %v1887
        %v1894 = vsel %vm1009, %v1869, 0
        %1896 = vmatprep.subr.bf16.mxu0 0
        %1897 = vmatpush1.bf16.msra.mxu0 0
        %1898 = vmatprep.subr.bf16.mxu0 0
        %1899 = vmatpush1.bf16.msra.mxu0 0
        %1900 = vmatprep.subr.bf16.mxu0 0
        %1901 = vmatpush1.bf16.msra.mxu0 0
        %1902 = vmatprep.subr.bf16.mxu0 0
        %1903 = vmatpush1.bf16.msra.mxu0 0
        %1904 = vmatprep.subr.bf16.mxu0 0
        %1905 = vmatpush1.bf16.msra.mxu0 0
        %1906 = vmatprep.subr.bf16.mxu0 0
        %1907 = vmatpush1.bf16.msra.mxu0 0
        %1908 = vmatprep.subr.bf16.mxu0 0
        %1909 = vmatpush1.bf16.msra.mxu0 %v1890
        %1910 = vmatprep.subr.bf16.mxu0 0
        %1911 = vmatpush1.bf16.msra.mxu0 %v1889
        %1912 = vmatprep.subr.bf16.mxu0 0
        %1913 = vmatpush2.bf16.msra.mxu0 0
        %1914 = vmatprep.subr.bf16.mxu0 0
        %1915 = vmatpush2.bf16.msra.mxu0 0
        %1916 = vmatprep.subr.bf16.mxu0 0
        %1917 = vmatpush2.bf16.msra.mxu0 0
        %1918 = vmatprep.subr.bf16.mxu0 0
        %1919 = vmatpush2.bf16.msra.mxu0 0
        %1920 = vmatprep.subr.bf16.mxu0 0
        %1921 = vmatpush2.bf16.msra.mxu0 0
        %1922 = vmatprep.subr.bf16.mxu0 0
        %1923 = vmatpush2.bf16.msra.mxu0 0
        %1924 = vmatprep.subr.bf16.mxu0 0
        %1925 = vmatpush2.bf16.msra.mxu0 0
        %1926 = vmatprep.subr.bf16.mxu0 0
        %1927 = vmatpush2.bf16.msra.mxu0 0
        %1928 = vmatprep.mubr.bf16.mxu0 0
        %1929 = vmatmul.mubr.bf16.gmra.mxu0 %v1894
        %v1930 = vpop.f32.mrf.mxu0
        %v1931 = vadd.f32 %v1879, %v1930
        %v1932 = vpop.f32.mrf.mxu0
        %v1933 = vpop.f32.mrf.mxu0
        %v1934 = vadd.f32 %v1879, %v1933
        %v1935 = vpop.f32.mrf.mxu0
        %1936 = vdwg.mxu0
        %1937 = vst [vmem:[%s24] sm:$0xff] %v1931
        %1938 = vst [vmem:[%s24 + $0x8] sm:$0xff] %v1934
        %v1939 = vpack.c.bf16 %v1861, %v1861
        %v1940 = vpack.c.bf16 %v1862, %v1862
        %v1941 = vld [vmem:[%s18] sm:$0xf]
        %v1942 = vld [vmem:[%s18 + $0x4] sm:$0xf]
        %v1943 = vld [vmem:[%s18 + $0x8] sm:$0xf]
        %v1944 = vld [vmem:[%s18 + $0xc] sm:$0xf]
        %v1945 = vld [vmem:[%s19] sm:$0x1]
        %v1947 = vlaneseq
        %v1948 = vshrl.u32 %v1947, 7
        %v1949 = vsub.s32 0, %v1948
        %v1950 = vrot.slane %v1945, %v1949
        %v1954 = vunpack.c.l.b16 %v1939
        %v1955 = vunpack.c.l.b16 %v1940
        %v1956 = vrot.slane %v1955, 7
        %vm1957 = vcmask 1041409
        %v1958 = vsel %vm1957, %v1956, %v1954
        %v1959 = vpack.c.b16 %v1958, %v1958
        %v1964 = vunpack.c.l.b16 %v1941
        %v1965 = vunpack.c.l.b16 %v1942
        %v1966 = vunpack.c.l.b16 %v1943
        %v1967 = vunpack.c.l.b16 %v1944
        %v1968 = vpack.c.b16 %v1965, %v1964
        %v1969 = vpack.c.b16 %v1967, %v1966
        %v1973 = vsel %vm1009, %v1959, 0
        %1975 = vmatprep.subr.bf16.mxu0 0
        %1976 = vmatpush1.bf16.msra.mxu0 0
        %1977 = vmatprep.subr.bf16.mxu0 0
        %1978 = vmatpush1.bf16.msra.mxu0 0
        %1979 = vmatprep.subr.bf16.mxu0 0
        %1980 = vmatpush1.bf16.msra.mxu0 0
        %1981 = vmatprep.subr.bf16.mxu0 0
        %1982 = vmatpush1.bf16.msra.mxu0 0
        %1983 = vmatprep.subr.bf16.mxu0 0
        %1984 = vmatpush1.bf16.msra.mxu0 0
        %1985 = vmatprep.subr.bf16.mxu0 0
        %1986 = vmatpush1.bf16.msra.mxu0 0
        %1987 = vmatprep.subr.bf16.mxu0 0
        %1988 = vmatpush1.bf16.msra.mxu0 %v1969
        %1989 = vmatprep.subr.bf16.mxu0 0
        %1990 = vmatpush1.bf16.msra.mxu0 %v1968
        %1991 = vmatprep.subr.bf16.mxu0 0
        %1992 = vmatpush2.bf16.msra.mxu0 0
        %1993 = vmatprep.subr.bf16.mxu0 0
        %1994 = vmatpush2.bf16.msra.mxu0 0
        %1995 = vmatprep.subr.bf16.mxu0 0
        %1996 = vmatpush2.bf16.msra.mxu0 0
        %1997 = vmatprep.subr.bf16.mxu0 0
        %1998 = vmatpush2.bf16.msra.mxu0 0
        %1999 = vmatprep.subr.bf16.mxu0 0
        %2000 = vmatpush2.bf16.msra.mxu0 0
        %2001 = vmatprep.subr.bf16.mxu0 0
        %2002 = vmatpush2.bf16.msra.mxu0 0
        %2003 = vmatprep.subr.bf16.mxu0 0
        %2004 = vmatpush2.bf16.msra.mxu0 0
        %2005 = vmatprep.subr.bf16.mxu0 0
        %2006 = vmatpush2.bf16.msra.mxu0 0
        %2007 = vmatprep.mubr.bf16.mxu0 0
        %2008 = vmatmul.mubr.bf16.gmra.mxu0 %v1973
        %v2009 = vpop.f32.mrf.mxu0
        %v2010 = vadd.f32 %v1950, %v2009
        %v2011 = vpop.f32.mrf.mxu0
        %v2012 = vpop.f32.mrf.mxu0
        %v2013 = vpop.f32.mrf.mxu0
        %2014 = vdwg.mxu0
        %v2015 = vtanh.pop %v2010
        %v2016 = vpack.c.bf16 %v2015, %v2015
        %v2017 = vld [vmem:[%s22] sm:$0xf]
        %v2018 = vld [vmem:[%s22 + $0x4] sm:$0xf]
        %v2019 = vld [vmem:[%s22 + $0x8] sm:$0xf]
        %v2020 = vld [vmem:[%s22 + $0xc] sm:$0xf]
        %v2021 = vld [vmem:[%s23] sm:$0x1]
        %v2023 = vlaneseq
        %v2024 = vshrl.u32 %v2023, 7
        %v2025 = vsub.s32 0, %v2024
        %v2026 = vrot.slane %v2021, %v2025
        %v2032 = vunpack.c.l.b16 %v2017
        %v2033 = vunpack.c.l.b16 %v2018
        %v2034 = vunpack.c.l.b16 %v2019
        %v2035 = vunpack.c.l.b16 %v2020
        %v2036 = vpack.c.b16 %v2033, %v2032
        %v2037 = vpack.c.b16 %v2035, %v2034
        %v2041 = vsel %vm1009, %v2016, 0
        %2043 = vmatprep.subr.bf16.mxu0 0
        %2044 = vmatpush1.bf16.msra.mxu0 0
        %2045 = vmatprep.subr.bf16.mxu0 0
        %2046 = vmatpush1.bf16.msra.mxu0 0
        %2047 = vmatprep.subr.bf16.mxu0 0
        %2048 = vmatpush1.bf16.msra.mxu0 0
        %2049 = vmatprep.subr.bf16.mxu0 0
        %2050 = vmatpush1.bf16.msra.mxu0 0
        %2051 = vmatprep.subr.bf16.mxu0 0
        %2052 = vmatpush1.bf16.msra.mxu0 0
        %2053 = vmatprep.subr.bf16.mxu0 0
        %2054 = vmatpush1.bf16.msra.mxu0 0
        %2055 = vmatprep.subr.bf16.mxu0 0
        %2056 = vmatpush1.bf16.msra.mxu0 %v2037
        %2057 = vmatprep.subr.bf16.mxu0 0
        %2058 = vmatpush1.bf16.msra.mxu0 %v2036
        %2059 = vmatprep.subr.bf16.mxu0 0
        %2060 = vmatpush2.bf16.msra.mxu0 0
        %2061 = vmatprep.subr.bf16.mxu0 0
        %2062 = vmatpush2.bf16.msra.mxu0 0
        %2063 = vmatprep.subr.bf16.mxu0 0
        %2064 = vmatpush2.bf16.msra.mxu0 0
        %2065 = vmatprep.subr.bf16.mxu0 0
        %2066 = vmatpush2.bf16.msra.mxu0 0
        %2067 = vmatprep.subr.bf16.mxu0 0
        %2068 = vmatpush2.bf16.msra.mxu0 0
        %2069 = vmatprep.subr.bf16.mxu0 0
        %2070 = vmatpush2.bf16.msra.mxu0 0
        %2071 = vmatprep.subr.bf16.mxu0 0
        %2072 = vmatpush2.bf16.msra.mxu0 0
        %2073 = vmatprep.subr.bf16.mxu0 0
        %2074 = vmatpush2.bf16.msra.mxu0 0
        %2075 = vmatprep.mubr.bf16.mxu0 0
        %2076 = vmatmul.mubr.bf16.gmra.mxu0 %v2041
        %v2077 = vpop.f32.mrf.mxu0
        %v2078 = vadd.f32 %v2026, %v2077
        %v2079 = vpop.f32.mrf.mxu0
        %v2080 = vpop.f32.mrf.mxu0
        %v2081 = vpop.f32.mrf.mxu0
        %2082 = vdwg.mxu0
        %v2083 = vlaneseq
        %v2084 = vand.u32 %v2083, 127
        %vm2085 = vcmp.ge.s32.totalorder %v2084, 3
        %vm2086 = vcmp.lt.s32.totalorder %v2084, 5
        %vm2087 = vmand %vm2085, %vm2086
        %v2088 = vxor.u32 %v2078, 2147483648
        %v2089 = vmul.f32 %v2088, 1.442695
        %v2090 = vpow.pop %v2089
        %v2091 = vadd.f32 %v2090, 1.0
        %v2092 = vrcp.pop %v2091
        %v2093 = vmul.f32 1.0, %v2092
        %v2094 = vsel %vm2087, %v2093, %v2078
        %2095 = vst [vmem:[%s25] sm:$0x3] %v2094
      $region124: #{bert_qa_forward.1} parent=115 // pred_fallthru
        _
      // Predicated region
      $region125: #{bert_qa_forward.1} parent=115 // pred_check
        %p2096 = pneg %p614
      $region126: #{bert_qa_forward.1} parent=115 // pred_check_branch
        %2098 = sbr.rel (%p2096) target = $region128
      $region127: #{bert_qa_forward.1} parent=115 // pred_region
        _
      $region128: #{bert_qa_forward.1} parent=115 // pred_fallthru
        _
      // Predicated region
      $region129: #{bert_qa_forward.1} parent=115 // pred_check
        %p2099 = pneg %p635
      $region130: #{bert_qa_forward.1} parent=115 // pred_check_branch
        %2101 = sbr.rel (%p2099) target = $region132
      $region131: #{bert_qa_forward.1} parent=115 // pred_region
        _
      $region132: #{bert_qa_forward.1} parent=115 // pred_fallthru
        _
      // Predicated region
      $region133: #{bert_qa_forward.1} parent=115 // pred_check
        %p2102 = pneg %p614
      $region134: #{bert_qa_forward.1} parent=115 // pred_check_branch
        %2104 = sbr.rel (%p2102) target = $region136
      $region135: #{bert_qa_forward.1} parent=115 // pred_region
        _
      $region136: #{bert_qa_forward.1} parent=115 // pred_fallthru
        _
      // Predicated region
      $region137: #{bert_qa_forward.1} parent=115 // pred_check
        %p2105 = pneg %p635
      $region138: #{bert_qa_forward.1} parent=115 // pred_check_branch
        %2107 = sbr.rel (%p2105) target = $region140
      $region139: #{bert_qa_forward.1} parent=115 // pred_region
        _
      $region140: #{bert_qa_forward.1} parent=115 // pred_fallthru
        _
    $region116: #{bert_qa_forward.1} parent=5 // pred_fallthru
      _
    %p2108 = scmp.le.s32.totalorder 2, %s32
    // Predicated region
    $region141: #{bert_qa_forward.1} parent=5 // pred_check
      %p2109 = pneg %p2108
    $region142: #{bert_qa_forward.1} parent=5 // pred_check_branch
      %2111 = sbr.rel (%p2109) target = $region144
    $region143: #{bert_qa_forward.1} parent=5 // pred_region
      %s2112 = ssub.s32 %s32, 2
    $region144: #{bert_qa_forward.1} parent=5 // pred_fallthru
      _
  $region6: #{bert_qa_forward.1} parent=0 // loop_footer
    %s36 = sadd.s32 1, %s32
  $region7: #{bert_qa_forward.1} parent=0 // loop_footer_branch
    %31 = sbr.rel target = $region3
  $region8: #{bert_qa_forward.1} parent=0 // loop_exit
    _

</llo_original>
